<compile_context>
chip_gen: v5e
topology: v5e:2x2
jax: 0.10.0
libtpu: 0.0.40
codegen_flags: <defaults>
</compile_context>

<pallas_src>
import functools

import jax
import jax.numpy as jnp
from jax.experimental import pallas as pl
from jax.experimental.pallas import tpu as pltpu


def _round_up(a, b):
    return (a + b - 1) // b * b


def motiongen_kernel(x_ref, w_ref, b_ref, tok_ref, kp_ref, dec_ref,
                     partials_ref, pred_ref, *, n_rows):
    TN = x_ref.shape[0]
    Cp = w_ref.shape[1]
    i = pl.program_id(0)

    # --- proj: Conv1d(music_dim, transformer_dim, 1) == matmul (MXU, bf16 x bf16 -> f32) ---
    x = x_ref[...].astype(jnp.bfloat16)
    logits = jnp.dot(x, w_ref[...], preferred_element_type=jnp.float32) + b_ref[...]  # [TN,Cp]

    # --- ragged-tile row mask: rows >= n_rows in the last tile hold undefined data ---
    row = jax.lax.broadcasted_iota(jnp.int32, (TN, 1), 0) + i * TN
    valid = row < n_rows                                                  # [TN, 1] bool

    # --- cross entropy pieces (F.cross_entropy, mean finished in wrapper) ---
    m = jnp.max(logits, axis=-1, keepdims=True)                           # [TN, 1]
    z = logits - m
    lse = jnp.log(jnp.sum(jnp.exp(z), axis=-1, keepdims=True))            # [TN, 1]

    tok = tok_ref[...]                                                    # [TN, 1] int32
    col = jax.lax.broadcasted_iota(jnp.int32, (TN, Cp), 1)
    z_t = jnp.sum(jnp.where(col == tok, z, 0.0), axis=-1, keepdims=True)  # [TN, 1]
    ce_rows = lse - z_t                                                   # -log p_target
    p_rows = jnp.exp(z_t - lse)                                           # softmax prob at target

    # --- argmax prediction (first maximal index, like torch.argmax), int32 throughout ---
    pred = jnp.min(jnp.where(logits == m, col, Cp), axis=-1, keepdims=True)   # [TN, 1] int32
    correct = jnp.where(valid & (pred == tok), 1.0, 0.0)

    # --- decode stub: codebook embedding lookup == one-hot matmul (MXU), per-row L1 sums.
    # TODO(synk): for production codebooks (C >= 1024) replace this O(N*C*D) matmul with a
    # scalar-prefetch row gather (pred fed as prefetch scalars to a pl.Element index_map on
    # the decoder table), keeping the L1 reduce fused.
    onehot_p = (col == pred).astype(jnp.bfloat16)                          # exact in bf16
    kp_pred = jnp.dot(onehot_p, dec_ref[...],
                      preferred_element_type=jnp.float32)                  # [TN, Dp]
    l1_rows = jnp.sum(jnp.abs(kp_pred - kp_ref[...].astype(jnp.float32)),
                      axis=-1, keepdims=True)                              # [TN, 1]

    # --- per-tile partial sums; jnp.where masking so undefined padded rows drop out ---
    ce_sum = jnp.sum(jnp.where(valid, ce_rows, 0.0))
    p_sum = jnp.sum(jnp.where(valid, p_rows, 0.0))
    acc_sum = jnp.sum(correct)
    l1_sum = jnp.sum(jnp.where(valid, l1_rows, 0.0))

    lane = jax.lax.broadcasted_iota(jnp.int32, (8, 128), 1)
    partials_ref[0] = (jnp.where(lane == 0, ce_sum, 0.0)
                       + jnp.where(lane == 1, p_sum, 0.0)
                       + jnp.where(lane == 2, acc_sum, 0.0)
                       + jnp.where(lane == 3, l1_sum, 0.0))

    # Lane-dense predicted-token store: full 128-lane unmasked vst (a (TN,1) column output
    # forces per-row masked partial stores).  Lane broadcast is a cheap native op; the
    # wrapper keeps column 0.
    # TODO(synk): for very large N switch to a (TN,1)->(TN//128,128) relayout to also cut
    # the pred HBM writeback 128x.
    pred_ref[...] = jnp.broadcast_to(pred, (TN, 128))


def _pick_tile_rows(Cm_p, C_p, D_p, x_itemsize, kp_itemsize, max_rows):
    """Largest 128-multiple row tile whose working set fits ~3/4 of this chip's VMEM."""
    try:
        vmem_cap = int(pltpu.get_tpu_info().vmem_capacity_bytes)
    except Exception:
        vmem_cap = 64 * 1024 * 1024            # conservative v7x-sized fallback
    budget = (vmem_cap * 3) // 4               # <= ~48 MiB on v7x, <= ~96 MiB on v5e/v6e
    # Resident operands are single-buffered (pl.Buffered(1)): proj weight/bias + decoder table.
    resident = Cm_p * C_p * 2 + 8 * C_p * 4 + C_p * D_p * 2
    tn = 128
    for cand in (1024, 768, 512, 384, 256, 128):
        if cand > max_rows:
            continue
        per_step = (2 * cand * Cm_p * x_itemsize       # x tile, double buffered
                    + 2 * cand * D_p * kp_itemsize     # keypoint tile, double buffered
                    + 2 * cand * 128 * 4               # (TN,1) tok tile lane-pads to 128 in VMEM
                    + 2 * cand * 128 * 4               # lane-dense pred output tile
                    + 2 * 8 * 128 * 4                  # partials output tile
                    + 6 * cand * C_p * 4               # [TN,C_p] f32 temporaries
                    + 2 * cand * D_p * 4)              # [TN,D_p] f32 decode/L1 temporaries
        if resident + per_step <= budget:
            tn = cand
            break
    return tn, budget


def motiongen_forward(music, keypoints, params, *, max_tile_rows=1024):
    """music: [B, T_s, music_dim] f32, keypoints: [B, T, J] f32 with T = T_s * r."""
    B, Ts, Cm = music.shape
    _, T, J = keypoints.shape
    r = T // Ts
    C = params["w"].shape[1]
    D = r * J
    N = B * Ts

    # TODO(synk): motion_vqvae.encode is an external checkpointed VQ-VAE; stubbed here as a
    # deterministic frame-pooled linear quantizer (argmax over codebook scores).
    pooled = keypoints.reshape(B, Ts, r, J).mean(axis=2)                     # [B, Ts, J]
    motion_tokens = jnp.argmax(pooled @ params["enc"], axis=-1).astype(jnp.int32)

    # TODO(synk): music_vqvae.encoder (Encoder1diff) is an external checkpointed module;
    # stubbed as identity, so `music` already carries per-token-timestep features.

    # ---- lane padding only where actually needed (wrapper pad copies are pure HBM traffic).
    # Cm only feeds the MXU contraction: when a copy is unavoidable pad it to 256 (v6e/v7x
    # MXU depth, costs no VPU work); when Cm is already 128-aligned skip the copy entirely
    # (the extra HBM pass would cost more than the half-filled MXU K-depth saves).
    Cm_p = Cm if Cm % 128 == 0 else _round_up(Cm, 256 if Cm >= 128 else 128)
    C_p = _round_up(C, 128)
    D_p = D if D % 128 == 0 else _round_up(D, 128)

    x = music.reshape(N, Cm)            # zero-copy reshape; kernel casts f32->bf16 per tile
    if Cm_p != Cm:
        x = jnp.zeros((N, Cm_p), jnp.bfloat16).at[:, :Cm].set(x.astype(jnp.bfloat16))
    kp = keypoints.reshape(N, D)        # zero-copy; largest per-tile DMA stream
    if D_p != D:
        kp = jnp.zeros((N, D_p), jnp.bfloat16).at[:, :D].set(kp.astype(jnp.bfloat16))
    tok = motion_tokens.reshape(N, 1)
    # TODO(synk): tok stays (N,1) (lane-sparse loads) to avoid an in-kernel relayout; its
    # traffic is negligible next to the x / keypoint streams.

    w = jnp.zeros((Cm_p, C_p), jnp.bfloat16).at[:Cm, :C].set(params["w"].astype(jnp.bfloat16))
    # padded logit columns get a huge negative (finite!) bias -> softmax/argmax ignore them.
    b = jnp.full((1, C_p), -1e30, jnp.float32).at[0, :C].set(params["b"].astype(jnp.float32))
    dec = jnp.zeros((C_p, D_p), jnp.bfloat16).at[:C, :D].set(params["dec"].astype(jnp.bfloat16))

    # ---- per-generation tile-row choice from the chip's actual VMEM capacity ----
    TN, vmem_limit = _pick_tile_rows(Cm_p, C_p, D_p, x.dtype.itemsize, kp.dtype.itemsize,
                                     max_tile_rows)
    TN = min(TN, _round_up(N, 128))
    if N > 128:
        # keep >= 2 tiles so the "parallel" grid axis can feed both v7x TensorCores.
        TN = min(TN, max(128, _round_up((N + 1) // 2, 128)))
    n_tiles = -(-N // TN)

    kernel = functools.partial(motiongen_kernel, n_rows=N)

    partials, pred = pl.pallas_call(
        kernel,
        grid=(n_tiles,),
        in_specs=[
            pl.BlockSpec((TN, Cm_p), lambda i: (i, 0)),          # x tile (pipelined)
            pl.BlockSpec((Cm_p, C_p), lambda i: (0, 0),
                         pipeline_mode=pl.Buffered(1)),          # proj weight (fetched once)
            pl.BlockSpec((1, C_p), lambda i: (0, 0),
                         pipeline_mode=pl.Buffered(1)),          # proj bias (fetched once)
            pl.BlockSpec((TN, 1), lambda i: (i, 0)),             # target tokens
            pl.BlockSpec((TN, D_p), lambda i: (i, 0)),           # keypoint target tile
            pl.BlockSpec((C_p, D_p), lambda i: (0, 0),
                         pipeline_mode=pl.Buffered(1)),          # decoder codebook (fetched once)
        ],
        out_specs=[
            pl.BlockSpec((1, 8, 128), lambda i: (i, 0, 0)),      # per-tile partial sums
            pl.BlockSpec((TN, 128), lambda i: (i, 0)),           # lane-dense predicted tokens
        ],
        out_shape=(
            jax.ShapeDtypeStruct((n_tiles, 8, 128), jnp.float32),
            jax.ShapeDtypeStruct((N, 128), jnp.int32),
        ),
        compiler_params=pltpu.CompilerParams(
            dimension_semantics=("parallel",),
            vmem_limit_bytes=int(vmem_limit),
        ),
    )(x, w, b, tok, kp, dec)

    totals = partials[:, 0, :4].sum(axis=0)        # [ce_sum, p_sum, acc_sum, l1_sum]
    loss = totals[0] / N
    metrics = {
        "correct_probability": totals[1] / N,
        "tokens_acc": totals[2] / N,
        "keypoints_loss": totals[3] / (N * D),
    }
    motion_tokens_preds = pred[:, 0].reshape(B, Ts)
    return loss, metrics, motion_tokens_preds


def _reference(music, keypoints, params):
    """Plain-JAX reference mirroring the kernel's bf16 operand rounding."""
    B, Ts, Cm = music.shape
    _, T, J = keypoints.shape
    r = T // Ts
    pooled = keypoints.reshape(B, Ts, r, J).mean(axis=2)
    tok = jnp.argmax(pooled @ params["enc"], axis=-1).reshape(-1)
    xb = music.reshape(-1, Cm).astype(jnp.bfloat16).astype(jnp.float32)
    wb = params["w"].astype(jnp.bfloat16).astype(jnp.float32)
    logits = xb @ wb + params["b"][None, :]
    logp = jax.nn.log_softmax(logits, axis=-1)
    lp_t = jnp.take_along_axis(logp, tok[:, None], axis=1)
    ce = -jnp.mean(lp_t)
    prob = jnp.mean(jnp.exp(lp_t))
    pred = jnp.argmax(logits, axis=-1)
    decb = params["dec"].astype(jnp.bfloat16).astype(jnp.float32)
    kp_pred = decb[pred]
    l1 = jnp.mean(jnp.abs(kp_pred - keypoints.reshape(-1, r * J)))
    return ce, prob, l1


def _run_case(name, B, Ts, Cm, C, T, J, key):
    r = T // Ts
    k1, k2, k3, k4, k5, k6 = jax.random.split(key, 6)
    music = jax.random.normal(k1, (B, Ts, Cm), jnp.float32)
    keypoints = jax.random.normal(k2, (B, T, J), jnp.float32)
    params = {
        "w": 0.02 * jax.random.normal(k3, (Cm, C), jnp.float32),      # proj Conv1d weight
        "b": 0.02 * jax.random.normal(k4, (C,), jnp.float32),         # proj Conv1d bias
        "enc": 0.1 * jax.random.normal(k5, (J, C), jnp.float32),      # motion VQ encoder stub
        "dec": 0.1 * jax.random.normal(k6, (C, r * J), jnp.float32),  # motion VQ decoder codebook stub
    }
    loss, metrics, preds = jax.jit(motiongen_forward)(music, keypoints, params)
    jax.block_until_ready((loss, metrics, preds))

    ce_ref, prob_ref, l1_ref = _reference(music, keypoints, params)
    assert jnp.isfinite(loss) and jnp.allclose(loss, ce_ref, atol=2e-2), name
    assert jnp.allclose(metrics["correct_probability"], prob_ref, atol=2e-2), name
    assert jnp.allclose(metrics["keypoints_loss"], l1_ref, atol=2e-2), name
    assert jnp.isfinite(metrics["tokens_acc"]), name
    assert 0.0 <= float(metrics["tokens_acc"]) <= 1.0, name
    assert preds.shape == (B, Ts) and preds.dtype == jnp.int32, name
    assert int(preds.min()) >= 0 and int(preds.max()) < C, name


if __name__ == "__main__":
    key = jax.random.PRNGKey(0)
    ka, kb = jax.random.split(key)
    # (1) unaligned dims -> padded bf16 input path (also exercises the ragged last tile: N < TN).
    _run_case("padded", B=2, Ts=8, Cm=32, C=32, T=16, J=16, key=ka)
    # (2) 128-aligned dims -> zero-copy f32 inputs, in-kernel bf16 cast, no wrapper padding.
    _run_case("aligned", B=2, Ts=64, Cm=128, C=128, T=128, J=64, key=kb)
    print("KERNEL_OK")
</pallas_src>

<mosaic_0001>
module attributes {stable_mosaic.version = 11 : i64} {
  func.func @motiongen_kernel(%arg0: i32, %arg1: memref<128x128xbf16, #tpu.memory_space<vmem>>, %arg2: memref<128x128xbf16, #tpu.memory_space<vmem>>, %arg3: memref<1x128xf32, #tpu.memory_space<vmem>>, %arg4: memref<128x1xi32, #tpu.memory_space<vmem>>, %arg5: memref<128x128xbf16, #tpu.memory_space<vmem>>, %arg6: memref<128x128xbf16, #tpu.memory_space<vmem>>, %arg7: memref<1x8x128xf32, #tpu.memory_space<vmem>>, %arg8: memref<128x128xi32, #tpu.memory_space<vmem>>) attributes {dimension_semantics = [#tpu.dimension_semantics<parallel>], iteration_bounds = array<i64: 1>, scalar_prefetch = 0 : i64, scratch_operands = 0 : i64, tpu.core_type = #tpu.core_type<tc>, window_params = [{transform_indices = @transform_0, window_bounds = array<i64: 128, 128>}, {pipeline_mode = #tpu.pipeline_mode<synchronous>, transform_indices = @transform_1, window_bounds = array<i64: 128, 128>}, {pipeline_mode = #tpu.pipeline_mode<synchronous>, transform_indices = @transform_2, window_bounds = array<i64: 1, 128>}, {transform_indices = @transform_3, window_bounds = array<i64: 128, 1>}, {transform_indices = @transform_4, window_bounds = array<i64: 128, 128>}, {pipeline_mode = #tpu.pipeline_mode<synchronous>, transform_indices = @transform_5, window_bounds = array<i64: 128, 128>}, {transform_indices = @transform_6, window_bounds = array<i64: 1, 8, 128>}, {transform_indices = @transform_7, window_bounds = array<i64: 128, 128>}]} {
    %c0 = arith.constant 0 : index
    %c0_0 = arith.constant 0 : index
    %0 = vector.load %arg1[%c0, %c0_0] : memref<128x128xbf16, #tpu.memory_space<vmem>>, vector<128x128xbf16>
    %c0_1 = arith.constant 0 : index
    %c0_2 = arith.constant 0 : index
    %1 = vector.load %arg2[%c0_1, %c0_2] : memref<128x128xbf16, #tpu.memory_space<vmem>>, vector<128x128xbf16>
    %cst = arith.constant dense<0.000000e+00> : vector<128x128xf32>
    %2 = tpu.matmul %0, %1, %cst {dimension_numbers = #tpu.dot_dimension_numbers<[1], [0], [0], [1], [0, 0, 1, 1], [], []>} : vector<128x128xbf16>, vector<128x128xbf16>, vector<128x128xf32> -> vector<128x128xf32>
    %c0_3 = arith.constant 0 : index
    %c0_4 = arith.constant 0 : index
    %3 = vector.load %arg3[%c0_3, %c0_4] : memref<1x128xf32, #tpu.memory_space<vmem>>, vector<1x128xf32>
    %4 = vector.broadcast %3 : vector<1x128xf32> to vector<128x128xf32>
    %5 = arith.addf %2, %4 : vector<128x128xf32>
    %6 = tpu.iota {dimensions = array<i32: 0>} : vector<128x1xi32>
    %c128_i32 = arith.constant 128 : i32
    %7 = arith.muli %arg0, %c128_i32 : i32
    %8 = vector.broadcast %7 : i32 to vector<128x1xi32>
    %9 = arith.addi %6, %8 : vector<128x1xi32>
    %c16_i32 = arith.constant 16 : i32
    %10 = vector.broadcast %c16_i32 : i32 to vector<128x1xi32>
    %11 = arith.cmpi slt, %9, %10 : vector<128x1xi32>
    %cst_5 = arith.constant dense<0xFF800000> : vector<128xf32>
    %12 = vector.multi_reduction <maximumf>, %5, %cst_5 [1] : vector<128x128xf32> to vector<128xf32>
    %13 = vector.shape_cast %12 : vector<128xf32> to vector<128x1xf32>
    %14 = vector.broadcast %13 : vector<128x1xf32> to vector<128x128xf32>
    %15 = arith.subf %5, %14 : vector<128x128xf32>
    %16 = math.exp %15 : vector<128x128xf32>
    %cst_6 = arith.constant dense<0.000000e+00> : vector<128xf32>
    %17 = vector.multi_reduction <add>, %16, %cst_6 [1] : vector<128x128xf32> to vector<128xf32>
    %18 = vector.shape_cast %17 : vector<128xf32> to vector<128x1xf32>
    %19 = math.log %18 : vector<128x1xf32>
    %c0_7 = arith.constant 0 : index
    %c0_8 = arith.constant 0 : index
    %20 = vector.load %arg4[%c0_7, %c0_8] : memref<128x1xi32, #tpu.memory_space<vmem>>, vector<128x1xi32>
    %21 = tpu.iota {dimensions = array<i32: 1>} : vector<128x128xi32>
    %22 = vector.broadcast %20 : vector<128x1xi32> to vector<128x128xi32>
    %23 = arith.cmpi eq, %21, %22 : vector<128x128xi32>
    %cst_9 = arith.constant 0.000000e+00 : f32
    %24 = vector.broadcast %cst_9 : f32 to vector<128x128xf32>
    %25 = arith.select %23, %15, %24 : vector<128x128xi1>, vector<128x128xf32>
    %cst_10 = arith.constant dense<0.000000e+00> : vector<128xf32>
    %26 = vector.multi_reduction <add>, %25, %cst_10 [1] : vector<128x128xf32> to vector<128xf32>
    %27 = vector.shape_cast %26 : vector<128xf32> to vector<128x1xf32>
    %28 = arith.subf %19, %27 : vector<128x1xf32>
    %29 = arith.subf %27, %19 : vector<128x1xf32>
    %30 = math.exp %29 : vector<128x1xf32>
    %31 = vector.broadcast %13 : vector<128x1xf32> to vector<128x128xf32>
    %32 = arith.cmpf oeq, %5, %31 : vector<128x128xf32>
    %c128_i32_11 = arith.constant 128 : i32
    %33 = vector.broadcast %c128_i32_11 : i32 to vector<128x128xi32>
    %34 = arith.select %32, %21, %33 : vector<128x128xi1>, vector<128x128xi32>
    %cst_12 = arith.constant dense<2147483647> : vector<128xi32>
    %35 = vector.multi_reduction <minsi>, %34, %cst_12 [1] : vector<128x128xi32> to vector<128xi32>
    %36 = vector.shape_cast %35 : vector<128xi32> to vector<128x1xi32>
    %37 = arith.cmpi eq, %36, %20 : vector<128x1xi32>
    %38 = arith.andi %11, %37 : vector<128x1xi1>
    %cst_13 = arith.constant 1.000000e+00 : f32
    %cst_14 = arith.constant 0.000000e+00 : f32
    %39 = vector.broadcast %cst_13 : f32 to vector<128x1xf32>
    %40 = vector.broadcast %cst_14 : f32 to vector<128x1xf32>
    %41 = arith.select %38, %39, %40 : vector<128x1xi1>, vector<128x1xf32>
    %42 = vector.broadcast %36 : vector<128x1xi32> to vector<128x128xi32>
    %43 = arith.cmpi eq, %21, %42 : vector<128x128xi32>
    %44 = arith.extui %43 : vector<128x128xi1> to vector<128x128xi32>
    %45 = arith.sitofp %44 : vector<128x128xi32> to vector<128x128xf32>
    %46 = arith.truncf %45 : vector<128x128xf32> to vector<128x128xbf16>
    %c0_15 = arith.constant 0 : index
    %c0_16 = arith.constant 0 : index
    %47 = vector.load %arg6[%c0_15, %c0_16] : memref<128x128xbf16, #tpu.memory_space<vmem>>, vector<128x128xbf16>
    %cst_17 = arith.constant dense<0.000000e+00> : vector<128x128xf32>
    %48 = tpu.matmul %46, %47, %cst_17 {dimension_numbers = #tpu.dot_dimension_numbers<[1], [0], [0], [1], [0, 0, 1, 1], [], []>} : vector<128x128xbf16>, vector<128x128xbf16>, vector<128x128xf32> -> vector<128x128xf32>
    %c0_18 = arith.constant 0 : index
    %c0_19 = arith.constant 0 : index
    %49 = vector.load %arg5[%c0_18, %c0_19] : memref<128x128xbf16, #tpu.memory_space<vmem>>, vector<128x128xbf16>
    %50 = arith.extf %49 : vector<128x128xbf16> to vector<128x128xf32>
    %51 = arith.subf %48, %50 : vector<128x128xf32>
    %52 = math.absf %51 : vector<128x128xf32>
    %cst_20 = arith.constant dense<0.000000e+00> : vector<128xf32>
    %53 = vector.multi_reduction <add>, %52, %cst_20 [1] : vector<128x128xf32> to vector<128xf32>
    %54 = vector.shape_cast %53 : vector<128xf32> to vector<128x1xf32>
    %cst_21 = arith.constant 0.000000e+00 : f32
    %55 = vector.broadcast %cst_21 : f32 to vector<128x1xf32>
    %56 = arith.select %11, %28, %55 : vector<128x1xi1>, vector<128x1xf32>
    %57 = vector.shape_cast %56 : vector<128x1xf32> to vector<1x128x1xf32>
    %cst_22 = arith.constant dense<0.000000e+00> : vector<1xf32>
    %58 = vector.multi_reduction <add>, %57, %cst_22 [1, 2] : vector<1x128x1xf32> to vector<1xf32>
    %59 = vector.shape_cast %58 : vector<1xf32> to vector<1x1x1xf32>
    %60 = vector.extract %59[0, 0, 0] : f32 from vector<1x1x1xf32>
    %cst_23 = arith.constant 0.000000e+00 : f32
    %61 = vector.broadcast %cst_23 : f32 to vector<128x1xf32>
    %62 = arith.select %11, %30, %61 : vector<128x1xi1>, vector<128x1xf32>
    %63 = vector.shape_cast %62 : vector<128x1xf32> to vector<1x128x1xf32>
    %cst_24 = arith.constant dense<0.000000e+00> : vector<1xf32>
    %64 = vector.multi_reduction <add>, %63, %cst_24 [1, 2] : vector<1x128x1xf32> to vector<1xf32>
    %65 = vector.shape_cast %64 : vector<1xf32> to vector<1x1x1xf32>
    %66 = vector.extract %65[0, 0, 0] : f32 from vector<1x1x1xf32>
    %67 = vector.shape_cast %41 : vector<128x1xf32> to vector<1x128x1xf32>
    %cst_25 = arith.constant dense<0.000000e+00> : vector<1xf32>
    %68 = vector.multi_reduction <add>, %67, %cst_25 [1, 2] : vector<1x128x1xf32> to vector<1xf32>
    %69 = vector.shape_cast %68 : vector<1xf32> to vector<1x1x1xf32>
    %70 = vector.extract %69[0, 0, 0] : f32 from vector<1x1x1xf32>
    %cst_26 = arith.constant 0.000000e+00 : f32
    %71 = vector.broadcast %cst_26 : f32 to vector<128x1xf32>
    %72 = arith.select %11, %54, %71 : vector<128x1xi1>, vector<128x1xf32>
    %73 = vector.shape_cast %72 : vector<128x1xf32> to vector<1x128x1xf32>
    %cst_27 = arith.constant dense<0.000000e+00> : vector<1xf32>
    %74 = vector.multi_reduction <add>, %73, %cst_27 [1, 2] : vector<1x128x1xf32> to vector<1xf32>
    %75 = vector.shape_cast %74 : vector<1xf32> to vector<1x1x1xf32>
    %76 = vector.extract %75[0, 0, 0] : f32 from vector<1x1x1xf32>
    %77 = tpu.iota {dimensions = array<i32: 1>} : vector<8x128xi32>
    %c0_i32 = arith.constant 0 : i32
    %78 = vector.broadcast %c0_i32 : i32 to vector<8x128xi32>
    %79 = arith.cmpi eq, %77, %78 : vector<8x128xi32>
    %cst_28 = arith.constant 0.000000e+00 : f32
    %80 = vector.broadcast %60 : f32 to vector<8x128xf32>
    %81 = vector.broadcast %cst_28 : f32 to vector<8x128xf32>
    %82 = arith.select %79, %80, %81 : vector<8x128xi1>, vector<8x128xf32>
    %c1_i32 = arith.constant 1 : i32
    %83 = vector.broadcast %c1_i32 : i32 to vector<8x128xi32>
    %84 = arith.cmpi eq, %77, %83 : vector<8x128xi32>
    %cst_29 = arith.constant 0.000000e+00 : f32
    %85 = vector.broadcast %66 : f32 to vector<8x128xf32>
    %86 = vector.broadcast %cst_29 : f32 to vector<8x128xf32>
    %87 = arith.select %84, %85, %86 : vector<8x128xi1>, vector<8x128xf32>
    %88 = arith.addf %82, %87 : vector<8x128xf32>
    %c2_i32 = arith.constant 2 : i32
    %89 = vector.broadcast %c2_i32 : i32 to vector<8x128xi32>
    %90 = arith.cmpi eq, %77, %89 : vector<8x128xi32>
    %cst_30 = arith.constant 0.000000e+00 : f32
    %91 = vector.broadcast %70 : f32 to vector<8x128xf32>
    %92 = vector.broadcast %cst_30 : f32 to vector<8x128xf32>
    %93 = arith.select %90, %91, %92 : vector<8x128xi1>, vector<8x128xf32>
    %94 = arith.addf %88, %93 : vector<8x128xf32>
    %c3_i32 = arith.constant 3 : i32
    %95 = vector.broadcast %c3_i32 : i32 to vector<8x128xi32>
    %96 = arith.cmpi eq, %77, %95 : vector<8x128xi32>
    %cst_31 = arith.constant 0.000000e+00 : f32
    %97 = vector.broadcast %76 : f32 to vector<8x128xf32>
    %98 = vector.broadcast %cst_31 : f32 to vector<8x128xf32>
    %99 = arith.select %96, %97, %98 : vector<8x128xi1>, vector<8x128xf32>
    %100 = arith.addf %94, %99 : vector<8x128xf32>
    %c0_32 = arith.constant 0 : index
    %c0_33 = arith.constant 0 : index
    %c0_34 = arith.constant 0 : index
    %101 = vector.load %arg7[%c0_32, %c0_33, %c0_34] : memref<1x8x128xf32, #tpu.memory_space<vmem>>, vector<1x8x128xf32>
    %102 = vector.shape_cast %101 : vector<1x8x128xf32> to vector<8x128xf32>
    %103 = vector.shape_cast %100 : vector<8x128xf32> to vector<1x8x128xf32>
    tpu.vector_store %arg7[%c0_32, %c0_33, %c0_34], %103 {strides = array<i32>} : memref<1x8x128xf32, #tpu.memory_space<vmem>>, vector<1x8x128xf32>,
    %104 = vector.shape_cast %36 : vector<128x1xi32> to vector<128x1xi32>
    %105 = vector.broadcast %104 : vector<128x1xi32> to vector<128x128xi32>
    %c0_35 = arith.constant 0 : index
    %c0_36 = arith.constant 0 : index
    %106 = vector.load %arg8[%c0_35, %c0_36] : memref<128x128xi32, #tpu.memory_space<vmem>>, vector<128x128xi32>
    tpu.vector_store %arg8[%c0_35, %c0_36], %105 {strides = array<i32>} : memref<128x128xi32, #tpu.memory_space<vmem>>, vector<128x128xi32>,
    return
  }
  func.func @transform_0(%arg0: i32) -> (i32, i32) {
    %c0_i32 = arith.constant 0 : i32
    %c0_i32_0 = arith.constant 0 : i32
    return %arg0, %c0_i32 : i32, i32
  }
  func.func @transform_1(%arg0: i32) -> (i32, i32) {
    %c0_i32 = arith.constant 0 : i32
    %c0_i32_0 = arith.constant 0 : i32
    %c0_i32_1 = arith.constant 0 : i32
    return %c0_i32, %c0_i32_0 : i32, i32
  }
  func.func @transform_2(%arg0: i32) -> (i32, i32) {
    %c0_i32 = arith.constant 0 : i32
    %c0_i32_0 = arith.constant 0 : i32
    %c0_i32_1 = arith.constant 0 : i32
    return %c0_i32, %c0_i32_0 : i32, i32
  }
  func.func @transform_3(%arg0: i32) -> (i32, i32) {
    %c0_i32 = arith.constant 0 : i32
    %c0_i32_0 = arith.constant 0 : i32
    return %arg0, %c0_i32 : i32, i32
  }
  func.func @transform_4(%arg0: i32) -> (i32, i32) {
    %c0_i32 = arith.constant 0 : i32
    %c0_i32_0 = arith.constant 0 : i32
    return %arg0, %c0_i32 : i32, i32
  }
  func.func @transform_5(%arg0: i32) -> (i32, i32) {
    %c0_i32 = arith.constant 0 : i32
    %c0_i32_0 = arith.constant 0 : i32
    %c0_i32_1 = arith.constant 0 : i32
    return %c0_i32, %c0_i32_0 : i32, i32
  }
  func.func @transform_6(%arg0: i32) -> (i32, i32, i32) {
    %c0_i32 = arith.constant 0 : i32
    %c0_i32_0 = arith.constant 0 : i32
    %c0_i32_1 = arith.constant 0 : i32
    return %arg0, %c0_i32, %c0_i32_0 : i32, i32, i32
  }
  func.func @transform_7(%arg0: i32) -> (i32, i32) {
    %c0_i32 = arith.constant 0 : i32
    %c0_i32_0 = arith.constant 0 : i32
    return %arg0, %c0_i32 : i32, i32
  }
}

</mosaic_0001>

<llo_original>
// kernel: squeeze.11
$region0: #{squeeze.11}
  %s0 = inlined_call_operand.vmem [shape: s32[16], index: 0, kind: input, shape index: {}]
  %s1 = inlined_call_operand.hbm [shape: s32[2,8], index: 1, kind: output, shape index: {}]
  $region1: #{squeeze.11} parent=0
    #allocation0 [shape = 'u8[1024]{0}', space=vmem, size = 0x400, scoped, tag = 'operand span for operand 1']
    #allocation1 [shape = 's32[1]{0}', space=sflag, size = 0x4, scoped, tag = 'scoped memory for squeeze.11']
    #allocation2 [shape = 'u8[4096]{0}', space=vmem, size = 0x1000, scoped, tag = 'scoped mem for output reshape']
    #allocation3 [shape = 'u8[4096]{0}', space=vmem, size = 0x1000, scoped, tag = 'scoped mem for input reshape']
    %2 = vsyncpa [#allocation1], 0
    %s4 = ssub.s32 2, 1
    %v5 = vld [vmem:[%s0] sm:%s4]
    %6 = vst [vmem:[#allocation3] sm:%s4] %v5
    %v7 = vld [vmem:[#allocation3] sm:$0x1]
    %vm8 = vcmask 64512
    %9 = vst.msk [vmem:[#allocation2] sm:$0x1] %vm8, %v7
    %v10 = vld [vmem:[#allocation3] sm:$0x1]
    %11 = vrot.lane.b32.xlu0 %v10, 120
    %v12 = vpop.permute.xlu0 %11
    %vm13 = vcmask 64512
    %s14 = scalar_lea.vmem [#allocation2], 1
    %15 = vst.msk [vmem:[%s14] sm:$0x1] %vm13, %v12
    %s17 = ssub.s32 4, 1
    %v18 = vld [vmem:[#allocation2] sm:%s17]
    %s20 = ssub.s32 4, 1
    %21 = vst [vmem:[#allocation0] sm:%s20] %v18
    %23 = vsyncadd [#allocation1], 0
    %s25 = sshll.u32 [#allocation0], 4
    %s26 = int_to_ptr.vmem [resolvable:$true] %s25
    %s27 = sshll.u32 %s1, 4
    %s28 = int_to_ptr.hbm [resolvable:$true] %s27
    %30 = dma.vmem_to_hbm [thread:$0]  %s26, 32, %s28, [#allocation1]
    %32 = dma.done [#allocation1], 32
    %33 = vsyncpa [#allocation1], 1

// kernel: motiongen_forward.1
$region0: #{motiongen_forward.1}
  #allocation0 [shape = 'u32[]', space=smem, size = 0x4, offset = 0x4, fixed_abs, tag = 'smem constant byte address 0x4 - core index']
  #allocation1 [shape = 'u32[72,128]{1,0:T(1,128)}', space=vmem, size = 0x9000, scoped, tag = 'internal scratch']
  %s0 = inlined_call_operand.vmem [shape: bf16[16,128], index: 0, kind: input, shape index: {}]
  %s1 = inlined_call_operand.vmem [shape: bf16[128,128], index: 1, kind: input, shape index: {}]
  %s2 = inlined_call_operand.vmem [shape: f32[1,128], index: 2, kind: input, shape index: {}]
  %s3 = inlined_call_operand.vmem [shape: s32[16,1], index: 3, kind: input, shape index: {}]
  %s4 = inlined_call_operand.vmem [shape: bf16[16,128], index: 4, kind: input, shape index: {}]
  %s5 = inlined_call_operand.vmem [shape: bf16[128,128], index: 5, kind: input, shape index: {}]
  %s6 = inlined_call_operand.vmem [shape: f32[1,8,128], index: 6, kind: output, shape index: {0}]
  %s7 = inlined_call_operand.vmem [shape: s32[16,128], index: 7, kind: output, shape index: {1}]
  %8 = xla_tuple %s6, %s7
  %s9 = sld [smem:[#allocation0]]
  $region76: #{motiongen_forward.1} parent=0
    _
  %s11 = ssub.s32 1, %s9
  %s12 = scalar_select 0, %s11, %s9
  $region1: #{motiongen_forward.1} parent=0
    #allocation2 [shape = 'u8[65536]{0}', space=vmem, size = 0x10000, scoped, tag = 'output window, operand 1, single buffered']
    // Predicated region
    $region2: #{motiongen_forward.1} parent=1 // pred_check
      _
    $region3: #{motiongen_forward.1} parent=1 // pred_check_branch
      %14 = sbr.rel (0) target = $region5
    $region4: #{motiongen_forward.1} parent=1 // pred_region
      _
    $region5: #{motiongen_forward.1} parent=1 // pred_fallthru
      _
    // Predicated region
    $region6: #{motiongen_forward.1} parent=1 // pred_check
      _
    $region7: #{motiongen_forward.1} parent=1 // pred_check_branch
      %16 = sbr.rel (0) target = $region9
    $region8: #{motiongen_forward.1} parent=1 // pred_region
      _
    $region9: #{motiongen_forward.1} parent=1 // pred_fallthru
      _
    // Predicated region
    $region10: #{motiongen_forward.1} parent=1 // pred_check
      _
    $region11: #{motiongen_forward.1} parent=1 // pred_check_branch
      %18 = sbr.rel (0) target = $region13
    $region12: #{motiongen_forward.1} parent=1 // pred_region
      _
    $region13: #{motiongen_forward.1} parent=1 // pred_fallthru
      _
    // Predicated region
    $region14: #{motiongen_forward.1} parent=1 // pred_check
      _
    $region15: #{motiongen_forward.1} parent=1 // pred_check_branch
      %20 = sbr.rel (0) target = $region17
    $region16: #{motiongen_forward.1} parent=1 // pred_region
      _
    $region17: #{motiongen_forward.1} parent=1 // pred_fallthru
      _
    // Predicated region
    $region18: #{motiongen_forward.1} parent=1 // pred_check
      _
    $region19: #{motiongen_forward.1} parent=1 // pred_check_branch
      %22 = sbr.rel (0) target = $region21
    $region20: #{motiongen_forward.1} parent=1 // pred_region
      _
    $region21: #{motiongen_forward.1} parent=1 // pred_fallthru
      _
    // Predicated region
    $region22: #{motiongen_forward.1} parent=1 // pred_check
      _
    $region23: #{motiongen_forward.1} parent=1 // pred_check_branch
      %24 = sbr.rel (0) target = $region25
    $region24: #{motiongen_forward.1} parent=1 // pred_region
      _
    $region25: #{motiongen_forward.1} parent=1 // pred_fallthru
      _
    %v25 = vld [vmem:[%s0] sm:$0xf]
    %v26 = vld [vmem:[%s0 + $0x4] sm:$0xf]
    %v27 = vld [vmem:[%s0 + $0x8] sm:$0xf]
    %v28 = vld [vmem:[%s0 + $0xc] sm:$0xf]
    %v29 = vld [vmem:[%s0 + $0x10] sm:$0xf]
    %v30 = vld [vmem:[%s0 + $0x14] sm:$0xf]
    %v31 = vld [vmem:[%s0 + $0x18] sm:$0xf]
    %v32 = vld [vmem:[%s0 + $0x1c] sm:$0xf]
    %v33 = vld [vmem:[%s0 + $0x20] sm:$0xf]
    %v34 = vld [vmem:[%s0 + $0x24] sm:$0xf]
    %v35 = vld [vmem:[%s0 + $0x28] sm:$0xf]
    %v36 = vld [vmem:[%s0 + $0x2c] sm:$0xf]
    %v37 = vld [vmem:[%s0 + $0x30] sm:$0xf]
    %v38 = vld [vmem:[%s0 + $0x34] sm:$0xf]
    %v39 = vld [vmem:[%s0 + $0x38] sm:$0xf]
    %v40 = vld [vmem:[%s0 + $0x3c] sm:$0xf]
    %v41 = vld [vmem:[%s1] sm:$0xf]
    %v42 = vld [vmem:[%s1 + $0x4] sm:$0xf]
    %v43 = vld [vmem:[%s1 + $0x8] sm:$0xf]
    %v44 = vld [vmem:[%s1 + $0xc] sm:$0xf]
    %v45 = vld [vmem:[%s1 + $0x10] sm:$0xf]
    %v46 = vld [vmem:[%s1 + $0x14] sm:$0xf]
    %v47 = vld [vmem:[%s1 + $0x18] sm:$0xf]
    %v48 = vld [vmem:[%s1 + $0x1c] sm:$0xf]
    %v49 = vld [vmem:[%s1 + $0x20] sm:$0xf]
    %v50 = vld [vmem:[%s1 + $0x24] sm:$0xf]
    %v51 = vld [vmem:[%s1 + $0x28] sm:$0xf]
    %v52 = vld [vmem:[%s1 + $0x2c] sm:$0xf]
    %v53 = vld [vmem:[%s1 + $0x30] sm:$0xf]
    %v54 = vld [vmem:[%s1 + $0x34] sm:$0xf]
    %v55 = vld [vmem:[%s1 + $0x38] sm:$0xf]
    %v56 = vld [vmem:[%s1 + $0x3c] sm:$0xf]
    %v57 = vld [vmem:[%s2] sm:$0x1]
    %v59 = vperm.slane %v57, 0
    %v77 = vunpack.c.l.b16 %v25
    %v78 = vunpack.c.l.b16 %v26
    %v79 = vunpack.c.l.b16 %v27
    %v80 = vunpack.c.l.b16 %v28
    %v81 = vunpack.c.l.b16 %v29
    %v82 = vunpack.c.l.b16 %v30
    %v83 = vunpack.c.l.b16 %v31
    %v84 = vunpack.c.l.b16 %v32
    %v85 = vunpack.c.l.b16 %v33
    %v86 = vunpack.c.l.b16 %v34
    %v87 = vunpack.c.l.b16 %v35
    %v88 = vunpack.c.l.b16 %v36
    %v89 = vunpack.c.l.b16 %v37
    %v90 = vunpack.c.l.b16 %v38
    %v91 = vunpack.c.l.b16 %v39
    %v92 = vunpack.c.l.b16 %v40
    %v93 = vpack.c.b16 %v78, %v77
    %v94 = vpack.c.b16 %v80, %v79
    %v95 = vpack.c.b16 %v82, %v81
    %v96 = vpack.c.b16 %v84, %v83
    %v97 = vpack.c.b16 %v86, %v85
    %v98 = vpack.c.b16 %v88, %v87
    %v99 = vpack.c.b16 %v90, %v89
    %v100 = vpack.c.b16 %v92, %v91
    %v125 = vunpack.c.l.b16 %v41
    %v126 = vunpack.c.l.b16 %v42
    %v127 = vunpack.c.l.b16 %v43
    %v128 = vunpack.c.l.b16 %v44
    %v129 = vunpack.c.l.b16 %v45
    %v130 = vunpack.c.l.b16 %v46
    %v131 = vunpack.c.l.b16 %v47
    %v132 = vunpack.c.l.b16 %v48
    %v133 = vunpack.c.l.b16 %v49
    %v134 = vunpack.c.l.b16 %v50
    %v135 = vunpack.c.l.b16 %v51
    %v136 = vunpack.c.l.b16 %v52
    %v137 = vunpack.c.l.b16 %v53
    %v138 = vunpack.c.l.b16 %v54
    %v139 = vunpack.c.l.b16 %v55
    %v140 = vunpack.c.l.b16 %v56
    %v141 = vpack.c.b16 %v126, %v125
    %v142 = vpack.c.b16 %v128, %v127
    %v143 = vpack.c.b16 %v130, %v129
    %v144 = vpack.c.b16 %v132, %v131
    %v145 = vpack.c.b16 %v134, %v133
    %v146 = vpack.c.b16 %v136, %v135
    %v147 = vpack.c.b16 %v138, %v137
    %v148 = vpack.c.b16 %v140, %v139
    %157 = vmatpush.bf16.msra.mxu0 %v148
    %158 = vmatpush.bf16.msra.mxu0 %v147
    %159 = vmatpush.bf16.msra.mxu0 %v146
    %160 = vmatpush.bf16.msra.mxu0 %v145
    %161 = vmatpush.bf16.msra.mxu0 %v144
    %162 = vmatpush.bf16.msra.mxu0 %v143
    %163 = vmatpush.bf16.msra.mxu0 %v142
    %164 = vmatpush.bf16.msra.mxu0 %v141
    %165 = vmatmul.bf16.gmra.mxu0 %v93
    %v166 = vpop.f32.mrf.mxu0
    %v167 = vadd.f32 %v59, %v166
    %v168 = vpop.f32.mrf.mxu0
    %v169 = vadd.f32 %v59, %v168
    %170 = vmatmul.bf16.gmra.mxu0 %v94
    %v171 = vpop.f32.mrf.mxu0
    %v172 = vadd.f32 %v59, %v171
    %v173 = vpop.f32.mrf.mxu0
    %v174 = vadd.f32 %v59, %v173
    %175 = vmatmul.bf16.gmra.mxu0 %v95
    %v176 = vpop.f32.mrf.mxu0
    %v177 = vadd.f32 %v59, %v176
    %v178 = vpop.f32.mrf.mxu0
    %v179 = vadd.f32 %v59, %v178
    %180 = vmatmul.bf16.gmra.mxu0 %v96
    %v181 = vpop.f32.mrf.mxu0
    %v182 = vadd.f32 %v59, %v181
    %v183 = vpop.f32.mrf.mxu0
    %v184 = vadd.f32 %v59, %v183
    %185 = vmatmul.bf16.gmra.mxu0 %v97
    %v186 = vpop.f32.mrf.mxu0
    %v187 = vadd.f32 %v59, %v186
    %v188 = vpop.f32.mrf.mxu0
    %v189 = vadd.f32 %v59, %v188
    %190 = vmatmul.bf16.gmra.mxu0 %v98
    %v191 = vpop.f32.mrf.mxu0
    %v192 = vadd.f32 %v59, %v191
    %v193 = vpop.f32.mrf.mxu0
    %v194 = vadd.f32 %v59, %v193
    %195 = vmatmul.bf16.gmra.mxu0 %v99
    %v196 = vpop.f32.mrf.mxu0
    %v197 = vadd.f32 %v59, %v196
    %v198 = vpop.f32.mrf.mxu0
    %v199 = vadd.f32 %v59, %v198
    %200 = vmatmul.bf16.gmra.mxu0 %v100
    %v201 = vpop.f32.mrf.mxu0
    %v202 = vadd.f32 %v59, %v201
    %v203 = vpop.f32.mrf.mxu0
    %v204 = vadd.f32 %v59, %v203
    %205 = vdwg.mxu0
    %v206 = vlaneseq
    %v207 = vshrl.u32 %v206, 7
    %v208 = vadd.s32 %v207, 8
    %v209 = vadd.s32 %v207, 16
    %v210 = vadd.s32 %v207, 24
    %v211 = vadd.s32 %v207, 32
    %v212 = vadd.s32 %v207, 40
    %v213 = vadd.s32 %v207, 48
    %v214 = vadd.s32 %v207, 56
    %v215 = vadd.s32 %v207, 64
    %v216 = vadd.s32 %v207, 72
    %v217 = vadd.s32 %v207, 80
    %v218 = vadd.s32 %v207, 88
    %v219 = vadd.s32 %v207, 96
    %v220 = vadd.s32 %v207, 104
    %v221 = vadd.s32 %v207, 112
    %v222 = vadd.s32 %v207, 120
    %s223 = smul.u32 0, 128
    %v224 = vstv %s223
    %v225 = vadd.s32 %v207, %v224
    %v226 = vadd.s32 %v208, %v224
    %v227 = vadd.s32 %v209, %v224
    %v228 = vadd.s32 %v210, %v224
    %v229 = vadd.s32 %v211, %v224
    %v230 = vadd.s32 %v212, %v224
    %v231 = vadd.s32 %v213, %v224
    %v232 = vadd.s32 %v214, %v224
    %v233 = vadd.s32 %v215, %v224
    %v234 = vadd.s32 %v216, %v224
    %v235 = vadd.s32 %v217, %v224
    %v236 = vadd.s32 %v218, %v224
    %v237 = vadd.s32 %v219, %v224
    %v238 = vadd.s32 %v220, %v224
    %v239 = vadd.s32 %v221, %v224
    %v240 = vadd.s32 %v222, %v224
    %vm241 = vcmp.lt.s32.totalorder %v225, 16
    %vm242 = vcmp.lt.s32.totalorder %v226, 16
    %vm243 = vcmp.lt.s32.totalorder %v227, 16
    %vm244 = vcmp.lt.s32.totalorder %v228, 16
    %vm245 = vcmp.lt.s32.totalorder %v229, 16
    %vm246 = vcmp.lt.s32.totalorder %v230, 16
    %vm247 = vcmp.lt.s32.totalorder %v231, 16
    %vm248 = vcmp.lt.s32.totalorder %v232, 16
    %vm249 = vcmp.lt.s32.totalorder %v233, 16
    %vm250 = vcmp.lt.s32.totalorder %v234, 16
    %vm251 = vcmp.lt.s32.totalorder %v235, 16
    %vm252 = vcmp.lt.s32.totalorder %v236, 16
    %vm253 = vcmp.lt.s32.totalorder %v237, 16
    %vm254 = vcmp.lt.s32.totalorder %v238, 16
    %vm255 = vcmp.lt.s32.totalorder %v239, 16
    %vm256 = vcmp.lt.s32.totalorder %v240, 16
    %257 = vmax.xlane.f32.xlu0 %v167
    %v258 = vpop.xlane.xlu0 %257
    %259 = vmax.xlane.f32.xlu0 %v169
    %v260 = vpop.xlane.xlu0 %259
    %261 = vmax.xlane.f32.xlu0 %v172
    %v262 = vpop.xlane.xlu0 %261
    %263 = vmax.xlane.f32.xlu0 %v174
    %v264 = vpop.xlane.xlu0 %263
    %265 = vmax.xlane.f32.xlu0 %v177
    %v266 = vpop.xlane.xlu0 %265
    %267 = vmax.xlane.f32.xlu0 %v179
    %v268 = vpop.xlane.xlu0 %267
    %269 = vmax.xlane.f32.xlu0 %v182
    %v270 = vpop.xlane.xlu0 %269
    %271 = vmax.xlane.f32.xlu0 %v184
    %v272 = vpop.xlane.xlu0 %271
    %273 = vmax.xlane.f32.xlu0 %v187
    %v274 = vpop.xlane.xlu0 %273
    %275 = vmax.xlane.f32.xlu0 %v189
    %v276 = vpop.xlane.xlu0 %275
    %277 = vmax.xlane.f32.xlu0 %v192
    %v278 = vpop.xlane.xlu0 %277
    %279 = vmax.xlane.f32.xlu0 %v194
    %v280 = vpop.xlane.xlu0 %279
    %281 = vmax.xlane.f32.xlu0 %v197
    %v282 = vpop.xlane.xlu0 %281
    %283 = vmax.xlane.f32.xlu0 %v199
    %v284 = vpop.xlane.xlu0 %283
    %285 = vmax.xlane.f32.xlu0 %v202
    %v286 = vpop.xlane.xlu0 %285
    %287 = vmax.xlane.f32.xlu0 %v204
    %v288 = vpop.xlane.xlu0 %287
    %v289 = vsub.f32 %v167, %v258
    %v290 = vsub.f32 %v169, %v260
    %v291 = vsub.f32 %v172, %v262
    %v292 = vsub.f32 %v174, %v264
    %v293 = vsub.f32 %v177, %v266
    %v294 = vsub.f32 %v179, %v268
    %v295 = vsub.f32 %v182, %v270
    %v296 = vsub.f32 %v184, %v272
    %v297 = vsub.f32 %v187, %v274
    %v298 = vsub.f32 %v189, %v276
    %v299 = vsub.f32 %v192, %v278
    %v300 = vsub.f32 %v194, %v280
    %v301 = vsub.f32 %v197, %v282
    %v302 = vsub.f32 %v199, %v284
    %v303 = vsub.f32 %v202, %v286
    %v304 = vsub.f32 %v204, %v288
    %v305 = vmul.f32 %v289, 1.442695
    %v306 = vpow.pop %v305
    %v307 = vmul.f32 %v290, 1.442695
    %v308 = vpow.pop %v307
    %v309 = vmul.f32 %v291, 1.442695
    %v310 = vpow.pop %v309
    %v311 = vmul.f32 %v292, 1.442695
    %v312 = vpow.pop %v311
    %v313 = vmul.f32 %v293, 1.442695
    %v314 = vpow.pop %v313
    %v315 = vmul.f32 %v294, 1.442695
    %v316 = vpow.pop %v315
    %v317 = vmul.f32 %v295, 1.442695
    %v318 = vpow.pop %v317
    %v319 = vmul.f32 %v296, 1.442695
    %v320 = vpow.pop %v319
    %v321 = vmul.f32 %v297, 1.442695
    %v322 = vpow.pop %v321
    %v323 = vmul.f32 %v298, 1.442695
    %v324 = vpow.pop %v323
    %v325 = vmul.f32 %v299, 1.442695
    %v326 = vpow.pop %v325
    %v327 = vmul.f32 %v300, 1.442695
    %v328 = vpow.pop %v327
    %v329 = vmul.f32 %v301, 1.442695
    %v330 = vpow.pop %v329
    %v331 = vmul.f32 %v302, 1.442695
    %v332 = vpow.pop %v331
    %v333 = vmul.f32 %v303, 1.442695
    %v334 = vpow.pop %v333
    %v335 = vmul.f32 %v304, 1.442695
    %v336 = vpow.pop %v335
    %337 = vadd.xlane.f32.xlu0 %v306
    %v338 = vpop.xlane.xlu0 %337
    %339 = vadd.xlane.f32.xlu0 %v308
    %v340 = vpop.xlane.xlu0 %339
    %341 = vadd.xlane.f32.xlu0 %v310
    %v342 = vpop.xlane.xlu0 %341
    %343 = vadd.xlane.f32.xlu0 %v312
    %v344 = vpop.xlane.xlu0 %343
    %345 = vadd.xlane.f32.xlu0 %v314
    %v346 = vpop.xlane.xlu0 %345
    %347 = vadd.xlane.f32.xlu0 %v316
    %v348 = vpop.xlane.xlu0 %347
    %349 = vadd.xlane.f32.xlu0 %v318
    %v350 = vpop.xlane.xlu0 %349
    %351 = vadd.xlane.f32.xlu0 %v320
    %v352 = vpop.xlane.xlu0 %351
    %353 = vadd.xlane.f32.xlu0 %v322
    %v354 = vpop.xlane.xlu0 %353
    %355 = vadd.xlane.f32.xlu0 %v324
    %v356 = vpop.xlane.xlu0 %355
    %357 = vadd.xlane.f32.xlu0 %v326
    %v358 = vpop.xlane.xlu0 %357
    %359 = vadd.xlane.f32.xlu0 %v328
    %v360 = vpop.xlane.xlu0 %359
    %361 = vadd.xlane.f32.xlu0 %v330
    %v362 = vpop.xlane.xlu0 %361
    %363 = vadd.xlane.f32.xlu0 %v332
    %v364 = vpop.xlane.xlu0 %363
    %365 = vadd.xlane.f32.xlu0 %v334
    %v366 = vpop.xlane.xlu0 %365
    %367 = vadd.xlane.f32.xlu0 %v336
    %v368 = vpop.xlane.xlu0 %367
    %v369 = vlog2.pop %v338
    %v370 = vmul.f32 %v369, 0.6931472
    %v371 = vlog2.pop %v340
    %v372 = vmul.f32 %v371, 0.6931472
    %v373 = vlog2.pop %v342
    %v374 = vmul.f32 %v373, 0.6931472
    %v375 = vlog2.pop %v344
    %v376 = vmul.f32 %v375, 0.6931472
    %v377 = vlog2.pop %v346
    %v378 = vmul.f32 %v377, 0.6931472
    %v379 = vlog2.pop %v348
    %v380 = vmul.f32 %v379, 0.6931472
    %v381 = vlog2.pop %v350
    %v382 = vmul.f32 %v381, 0.6931472
    %v383 = vlog2.pop %v352
    %v384 = vmul.f32 %v383, 0.6931472
    %v385 = vlog2.pop %v354
    %v386 = vmul.f32 %v385, 0.6931472
    %v387 = vlog2.pop %v356
    %v388 = vmul.f32 %v387, 0.6931472
    %v389 = vlog2.pop %v358
    %v390 = vmul.f32 %v389, 0.6931472
    %v391 = vlog2.pop %v360
    %v392 = vmul.f32 %v391, 0.6931472
    %v393 = vlog2.pop %v362
    %v394 = vmul.f32 %v393, 0.6931472
    %v395 = vlog2.pop %v364
    %v396 = vmul.f32 %v395, 0.6931472
    %v397 = vlog2.pop %v366
    %v398 = vmul.f32 %v397, 0.6931472
    %v399 = vlog2.pop %v368
    %v400 = vmul.f32 %v399, 0.6931472
    %v401 = vld [vmem:[%s3] sm:$0xff]
    %v402 = vld [vmem:[%s3 + $0x8] sm:$0xff]
    %v403 = vld [vmem:[%s3 + $0x10] sm:$0xff]
    %v404 = vld [vmem:[%s3 + $0x18] sm:$0xff]
    %v405 = vld [vmem:[%s3 + $0x20] sm:$0xff]
    %v406 = vld [vmem:[%s3 + $0x28] sm:$0xff]
    %v407 = vld [vmem:[%s3 + $0x30] sm:$0xff]
    %v408 = vld [vmem:[%s3 + $0x38] sm:$0xff]
    %v409 = vld [vmem:[%s3 + $0x40] sm:$0xff]
    %v410 = vld [vmem:[%s3 + $0x48] sm:$0xff]
    %v411 = vld [vmem:[%s3 + $0x50] sm:$0xff]
    %v412 = vld [vmem:[%s3 + $0x58] sm:$0xff]
    %v413 = vld [vmem:[%s3 + $0x60] sm:$0xff]
    %v414 = vld [vmem:[%s3 + $0x68] sm:$0xff]
    %v415 = vld [vmem:[%s3 + $0x70] sm:$0xff]
    %v416 = vld [vmem:[%s3 + $0x78] sm:$0xff]
    %v417 = vlaneseq
    %v418 = vand.u32 %v417, 127
    %419 = vset.pattern.permute.xlu0 0
    %420 = vperm.xlu0 %419, %v401
    %v421 = vpop.permute.xlu0 %420
    %422 = vset.pattern.permute.xlu0 0
    %423 = vperm.xlu0 %422, %v402
    %v424 = vpop.permute.xlu0 %423
    %425 = vset.pattern.permute.xlu0 0
    %426 = vperm.xlu0 %425, %v403
    %v427 = vpop.permute.xlu0 %426
    %428 = vset.pattern.permute.xlu0 0
    %429 = vperm.xlu0 %428, %v404
    %v430 = vpop.permute.xlu0 %429
    %431 = vset.pattern.permute.xlu0 0
    %432 = vperm.xlu0 %431, %v405
    %v433 = vpop.permute.xlu0 %432
    %434 = vset.pattern.permute.xlu0 0
    %435 = vperm.xlu0 %434, %v406
    %v436 = vpop.permute.xlu0 %435
    %437 = vset.pattern.permute.xlu0 0
    %438 = vperm.xlu0 %437, %v407
    %v439 = vpop.permute.xlu0 %438
    %440 = vset.pattern.permute.xlu0 0
    %441 = vperm.xlu0 %440, %v408
    %v442 = vpop.permute.xlu0 %441
    %443 = vset.pattern.permute.xlu0 0
    %444 = vperm.xlu0 %443, %v409
    %v445 = vpop.permute.xlu0 %444
    %446 = vset.pattern.permute.xlu0 0
    %447 = vperm.xlu0 %446, %v410
    %v448 = vpop.permute.xlu0 %447
    %449 = vset.pattern.permute.xlu0 0
    %450 = vperm.xlu0 %449, %v411
    %v451 = vpop.permute.xlu0 %450
    %452 = vset.pattern.permute.xlu0 0
    %453 = vperm.xlu0 %452, %v412
    %v454 = vpop.permute.xlu0 %453
    %455 = vset.pattern.permute.xlu0 0
    %456 = vperm.xlu0 %455, %v413
    %v457 = vpop.permute.xlu0 %456
    %458 = vset.pattern.permute.xlu0 0
    %459 = vperm.xlu0 %458, %v414
    %v460 = vpop.permute.xlu0 %459
    %461 = vset.pattern.permute.xlu0 0
    %462 = vperm.xlu0 %461, %v415
    %v463 = vpop.permute.xlu0 %462
    %464 = vset.pattern.permute.xlu0 0
    %465 = vperm.xlu0 %464, %v416
    %v466 = vpop.permute.xlu0 %465
    %vm467 = vcmp.eq.s32.totalorder %v418, %v421
    %vm468 = vcmp.eq.s32.totalorder %v418, %v424
    %vm469 = vcmp.eq.s32.totalorder %v418, %v427
    %vm470 = vcmp.eq.s32.totalorder %v418, %v430
    %vm471 = vcmp.eq.s32.totalorder %v418, %v433
    %vm472 = vcmp.eq.s32.totalorder %v418, %v436
    %vm473 = vcmp.eq.s32.totalorder %v418, %v439
    %vm474 = vcmp.eq.s32.totalorder %v418, %v442
    %vm475 = vcmp.eq.s32.totalorder %v418, %v445
    %vm476 = vcmp.eq.s32.totalorder %v418, %v448
    %vm477 = vcmp.eq.s32.totalorder %v418, %v451
    %vm478 = vcmp.eq.s32.totalorder %v418, %v454
    %vm479 = vcmp.eq.s32.totalorder %v418, %v457
    %vm480 = vcmp.eq.s32.totalorder %v418, %v460
    %vm481 = vcmp.eq.s32.totalorder %v418, %v463
    %vm482 = vcmp.eq.s32.totalorder %v418, %v466
    %v483 = vsel %vm467, %v289, 0.0
    %v484 = vsel %vm468, %v290, 0.0
    %v485 = vsel %vm469, %v291, 0.0
    %v486 = vsel %vm470, %v292, 0.0
    %v487 = vsel %vm471, %v293, 0.0
    %v488 = vsel %vm472, %v294, 0.0
    %v489 = vsel %vm473, %v295, 0.0
    %v490 = vsel %vm474, %v296, 0.0
    %v491 = vsel %vm475, %v297, 0.0
    %v492 = vsel %vm476, %v298, 0.0
    %v493 = vsel %vm477, %v299, 0.0
    %v494 = vsel %vm478, %v300, 0.0
    %v495 = vsel %vm479, %v301, 0.0
    %v496 = vsel %vm480, %v302, 0.0
    %v497 = vsel %vm481, %v303, 0.0
    %v498 = vsel %vm482, %v304, 0.0
    %499 = vadd.xlane.f32.xlu0 %v483
    %v500 = vpop.xlane.xlu0 %499
    %501 = vadd.xlane.f32.xlu0 %v484
    %v502 = vpop.xlane.xlu0 %501
    %503 = vadd.xlane.f32.xlu0 %v485
    %v504 = vpop.xlane.xlu0 %503
    %505 = vadd.xlane.f32.xlu0 %v486
    %v506 = vpop.xlane.xlu0 %505
    %507 = vadd.xlane.f32.xlu0 %v487
    %v508 = vpop.xlane.xlu0 %507
    %509 = vadd.xlane.f32.xlu0 %v488
    %v510 = vpop.xlane.xlu0 %509
    %511 = vadd.xlane.f32.xlu0 %v489
    %v512 = vpop.xlane.xlu0 %511
    %513 = vadd.xlane.f32.xlu0 %v490
    %v514 = vpop.xlane.xlu0 %513
    %515 = vadd.xlane.f32.xlu0 %v491
    %v516 = vpop.xlane.xlu0 %515
    %517 = vadd.xlane.f32.xlu0 %v492
    %v518 = vpop.xlane.xlu0 %517
    %519 = vadd.xlane.f32.xlu0 %v493
    %v520 = vpop.xlane.xlu0 %519
    %521 = vadd.xlane.f32.xlu0 %v494
    %v522 = vpop.xlane.xlu0 %521
    %523 = vadd.xlane.f32.xlu0 %v495
    %v524 = vpop.xlane.xlu0 %523
    %525 = vadd.xlane.f32.xlu0 %v496
    %v526 = vpop.xlane.xlu0 %525
    %527 = vadd.xlane.f32.xlu0 %v497
    %v528 = vpop.xlane.xlu0 %527
    %529 = vadd.xlane.f32.xlu0 %v498
    %v530 = vpop.xlane.xlu0 %529
    %v531 = vsub.f32 %v370, %v500
    %v532 = vsub.f32 %v372, %v502
    %v533 = vsub.f32 %v374, %v504
    %v534 = vsub.f32 %v376, %v506
    %v535 = vsub.f32 %v378, %v508
    %v536 = vsub.f32 %v380, %v510
    %v537 = vsub.f32 %v382, %v512
    %v538 = vsub.f32 %v384, %v514
    %v539 = vsub.f32 %v386, %v516
    %v540 = vsub.f32 %v388, %v518
    %v541 = vsub.f32 %v390, %v520
    %v542 = vsub.f32 %v392, %v522
    %v543 = vsub.f32 %v394, %v524
    %v544 = vsub.f32 %v396, %v526
    %v545 = vsub.f32 %v398, %v528
    %v546 = vsub.f32 %v400, %v530
    %v547 = vsub.f32 %v500, %v370
    %v548 = vsub.f32 %v502, %v372
    %v549 = vsub.f32 %v504, %v374
    %v550 = vsub.f32 %v506, %v376
    %v551 = vsub.f32 %v508, %v378
    %v552 = vsub.f32 %v510, %v380
    %v553 = vsub.f32 %v512, %v382
    %v554 = vsub.f32 %v514, %v384
    %v555 = vsub.f32 %v516, %v386
    %v556 = vsub.f32 %v518, %v388
    %v557 = vsub.f32 %v520, %v390
    %v558 = vsub.f32 %v522, %v392
    %v559 = vsub.f32 %v524, %v394
    %v560 = vsub.f32 %v526, %v396
    %v561 = vsub.f32 %v528, %v398
    %v562 = vsub.f32 %v530, %v400
    %v563 = vmul.f32 %v547, 1.442695
    %v564 = vpow.pop %v563
    %v565 = vmul.f32 %v548, 1.442695
    %v566 = vpow.pop %v565
    %v567 = vmul.f32 %v549, 1.442695
    %v568 = vpow.pop %v567
    %v569 = vmul.f32 %v550, 1.442695
    %v570 = vpow.pop %v569
    %v571 = vmul.f32 %v551, 1.442695
    %v572 = vpow.pop %v571
    %v573 = vmul.f32 %v552, 1.442695
    %v574 = vpow.pop %v573
    %v575 = vmul.f32 %v553, 1.442695
    %v576 = vpow.pop %v575
    %v577 = vmul.f32 %v554, 1.442695
    %v578 = vpow.pop %v577
    %v579 = vmul.f32 %v555, 1.442695
    %v580 = vpow.pop %v579
    %v581 = vmul.f32 %v556, 1.442695
    %v582 = vpow.pop %v581
    %v583 = vmul.f32 %v557, 1.442695
    %v584 = vpow.pop %v583
    %v585 = vmul.f32 %v558, 1.442695
    %v586 = vpow.pop %v585
    %v587 = vmul.f32 %v559, 1.442695
    %v588 = vpow.pop %v587
    %v589 = vmul.f32 %v560, 1.442695
    %v590 = vpow.pop %v589
    %v591 = vmul.f32 %v561, 1.442695
    %v592 = vpow.pop %v591
    %v593 = vmul.f32 %v562, 1.442695
    %v594 = vpow.pop %v593
    %vm595 = vcmp.eq.f32.partialorder %v167, %v258
    %vm596 = vcmp.eq.f32.partialorder %v169, %v260
    %vm597 = vcmp.eq.f32.partialorder %v172, %v262
    %vm598 = vcmp.eq.f32.partialorder %v174, %v264
    %vm599 = vcmp.eq.f32.partialorder %v177, %v266
    %vm600 = vcmp.eq.f32.partialorder %v179, %v268
    %vm601 = vcmp.eq.f32.partialorder %v182, %v270
    %vm602 = vcmp.eq.f32.partialorder %v184, %v272
    %vm603 = vcmp.eq.f32.partialorder %v187, %v274
    %vm604 = vcmp.eq.f32.partialorder %v189, %v276
    %vm605 = vcmp.eq.f32.partialorder %v192, %v278
    %vm606 = vcmp.eq.f32.partialorder %v194, %v280
    %vm607 = vcmp.eq.f32.partialorder %v197, %v282
    %vm608 = vcmp.eq.f32.partialorder %v199, %v284
    %vm609 = vcmp.eq.f32.partialorder %v202, %v286
    %vm610 = vcmp.eq.f32.partialorder %v204, %v288
    %v611 = vsel %vm595, %v418, 128
    %v612 = vsel %vm596, %v418, 128
    %v613 = vsel %vm597, %v418, 128
    %v614 = vsel %vm598, %v418, 128
    %v615 = vsel %vm599, %v418, 128
    %v616 = vsel %vm600, %v418, 128
    %v617 = vsel %vm601, %v418, 128
    %v618 = vsel %vm602, %v418, 128
    %v619 = vsel %vm603, %v418, 128
    %v620 = vsel %vm604, %v418, 128
    %v621 = vsel %vm605, %v418, 128
    %v622 = vsel %vm606, %v418, 128
    %v623 = vsel %vm607, %v418, 128
    %v624 = vsel %vm608, %v418, 128
    %v625 = vsel %vm609, %v418, 128
    %v626 = vsel %vm610, %v418, 128
    %v627 = vand.u32 %v611, 65535
    %v628 = vshra.s32 %v611, 16
    %v629 = vcvt.s32.f32 %v627
    %v630 = vcvt.s32.f32 %v628
    %631 = vmin.xlane.f32.xlu0 %v630
    %v632 = vpop.xlane.xlu0 %631
    %vm633 = vcmp.eq.f32.partialorder %v630, %v632
    %v634 = vsel %vm633, %v629, inf
    %635 = vmin.xlane.f32.xlu0 %v634
    %v636 = vpop.xlane.xlu0 %635
    %v637 = vcvt.f32.s32 %v636
    %v638 = vcvt.f32.s32 %v632
    %v639 = vshll.u32 %v638, 16
    %v640 = vadd.s32 %v639, %v637
    %v641 = vand.u32 %v612, 65535
    %v642 = vshra.s32 %v612, 16
    %v643 = vcvt.s32.f32 %v641
    %v644 = vcvt.s32.f32 %v642
    %645 = vmin.xlane.f32.xlu0 %v644
    %v646 = vpop.xlane.xlu0 %645
    %vm647 = vcmp.eq.f32.partialorder %v644, %v646
    %v648 = vsel %vm647, %v643, inf
    %649 = vmin.xlane.f32.xlu0 %v648
    %v650 = vpop.xlane.xlu0 %649
    %v651 = vcvt.f32.s32 %v650
    %v652 = vcvt.f32.s32 %v646
    %v653 = vshll.u32 %v652, 16
    %v654 = vadd.s32 %v653, %v651
    %v655 = vand.u32 %v613, 65535
    %v656 = vshra.s32 %v613, 16
    %v657 = vcvt.s32.f32 %v655
    %v658 = vcvt.s32.f32 %v656
    %659 = vmin.xlane.f32.xlu0 %v658
    %v660 = vpop.xlane.xlu0 %659
    %vm661 = vcmp.eq.f32.partialorder %v658, %v660
    %v662 = vsel %vm661, %v657, inf
    %663 = vmin.xlane.f32.xlu0 %v662
    %v664 = vpop.xlane.xlu0 %663
    %v665 = vcvt.f32.s32 %v664
    %v666 = vcvt.f32.s32 %v660
    %v667 = vshll.u32 %v666, 16
    %v668 = vadd.s32 %v667, %v665
    %v669 = vand.u32 %v614, 65535
    %v670 = vshra.s32 %v614, 16
    %v671 = vcvt.s32.f32 %v669
    %v672 = vcvt.s32.f32 %v670
    %673 = vmin.xlane.f32.xlu0 %v672
    %v674 = vpop.xlane.xlu0 %673
    %vm675 = vcmp.eq.f32.partialorder %v672, %v674
    %v676 = vsel %vm675, %v671, inf
    %677 = vmin.xlane.f32.xlu0 %v676
    %v678 = vpop.xlane.xlu0 %677
    %v679 = vcvt.f32.s32 %v678
    %v680 = vcvt.f32.s32 %v674
    %v681 = vshll.u32 %v680, 16
    %v682 = vadd.s32 %v681, %v679
    %v683 = vand.u32 %v615, 65535
    %v684 = vshra.s32 %v615, 16
    %v685 = vcvt.s32.f32 %v683
    %v686 = vcvt.s32.f32 %v684
    %687 = vmin.xlane.f32.xlu0 %v686
    %v688 = vpop.xlane.xlu0 %687
    %vm689 = vcmp.eq.f32.partialorder %v686, %v688
    %v690 = vsel %vm689, %v685, inf
    %691 = vmin.xlane.f32.xlu0 %v690
    %v692 = vpop.xlane.xlu0 %691
    %v693 = vcvt.f32.s32 %v692
    %v694 = vcvt.f32.s32 %v688
    %v695 = vshll.u32 %v694, 16
    %v696 = vadd.s32 %v695, %v693
    %v697 = vand.u32 %v616, 65535
    %v698 = vshra.s32 %v616, 16
    %v699 = vcvt.s32.f32 %v697
    %v700 = vcvt.s32.f32 %v698
    %701 = vmin.xlane.f32.xlu0 %v700
    %v702 = vpop.xlane.xlu0 %701
    %vm703 = vcmp.eq.f32.partialorder %v700, %v702
    %v704 = vsel %vm703, %v699, inf
    %705 = vmin.xlane.f32.xlu0 %v704
    %v706 = vpop.xlane.xlu0 %705
    %v707 = vcvt.f32.s32 %v706
    %v708 = vcvt.f32.s32 %v702
    %v709 = vshll.u32 %v708, 16
    %v710 = vadd.s32 %v709, %v707
    %v711 = vand.u32 %v617, 65535
    %v712 = vshra.s32 %v617, 16
    %v713 = vcvt.s32.f32 %v711
    %v714 = vcvt.s32.f32 %v712
    %715 = vmin.xlane.f32.xlu0 %v714
    %v716 = vpop.xlane.xlu0 %715
    %vm717 = vcmp.eq.f32.partialorder %v714, %v716
    %v718 = vsel %vm717, %v713, inf
    %719 = vmin.xlane.f32.xlu0 %v718
    %v720 = vpop.xlane.xlu0 %719
    %v721 = vcvt.f32.s32 %v720
    %v722 = vcvt.f32.s32 %v716
    %v723 = vshll.u32 %v722, 16
    %v724 = vadd.s32 %v723, %v721
    %v725 = vand.u32 %v618, 65535
    %v726 = vshra.s32 %v618, 16
    %v727 = vcvt.s32.f32 %v725
    %v728 = vcvt.s32.f32 %v726
    %729 = vmin.xlane.f32.xlu0 %v728
    %v730 = vpop.xlane.xlu0 %729
    %vm731 = vcmp.eq.f32.partialorder %v728, %v730
    %v732 = vsel %vm731, %v727, inf
    %733 = vmin.xlane.f32.xlu0 %v732
    %v734 = vpop.xlane.xlu0 %733
    %v735 = vcvt.f32.s32 %v734
    %v736 = vcvt.f32.s32 %v730
    %v737 = vshll.u32 %v736, 16
    %v738 = vadd.s32 %v737, %v735
    %v739 = vand.u32 %v619, 65535
    %v740 = vshra.s32 %v619, 16
    %v741 = vcvt.s32.f32 %v739
    %v742 = vcvt.s32.f32 %v740
    %743 = vmin.xlane.f32.xlu0 %v742
    %v744 = vpop.xlane.xlu0 %743
    %vm745 = vcmp.eq.f32.partialorder %v742, %v744
    %v746 = vsel %vm745, %v741, inf
    %747 = vmin.xlane.f32.xlu0 %v746
    %v748 = vpop.xlane.xlu0 %747
    %v749 = vcvt.f32.s32 %v748
    %v750 = vcvt.f32.s32 %v744
    %v751 = vshll.u32 %v750, 16
    %v752 = vadd.s32 %v751, %v749
    %v753 = vand.u32 %v620, 65535
    %v754 = vshra.s32 %v620, 16
    %v755 = vcvt.s32.f32 %v753
    %v756 = vcvt.s32.f32 %v754
    %757 = vmin.xlane.f32.xlu0 %v756
    %v758 = vpop.xlane.xlu0 %757
    %vm759 = vcmp.eq.f32.partialorder %v756, %v758
    %v760 = vsel %vm759, %v755, inf
    %761 = vmin.xlane.f32.xlu0 %v760
    %v762 = vpop.xlane.xlu0 %761
    %v763 = vcvt.f32.s32 %v762
    %v764 = vcvt.f32.s32 %v758
    %v765 = vshll.u32 %v764, 16
    %v766 = vadd.s32 %v765, %v763
    %v767 = vand.u32 %v621, 65535
    %v768 = vshra.s32 %v621, 16
    %v769 = vcvt.s32.f32 %v767
    %v770 = vcvt.s32.f32 %v768
    %771 = vmin.xlane.f32.xlu0 %v770
    %v772 = vpop.xlane.xlu0 %771
    %vm773 = vcmp.eq.f32.partialorder %v770, %v772
    %v774 = vsel %vm773, %v769, inf
    %775 = vmin.xlane.f32.xlu0 %v774
    %v776 = vpop.xlane.xlu0 %775
    %v777 = vcvt.f32.s32 %v776
    %v778 = vcvt.f32.s32 %v772
    %v779 = vshll.u32 %v778, 16
    %v780 = vadd.s32 %v779, %v777
    %v781 = vand.u32 %v622, 65535
    %v782 = vshra.s32 %v622, 16
    %v783 = vcvt.s32.f32 %v781
    %v784 = vcvt.s32.f32 %v782
    %785 = vmin.xlane.f32.xlu0 %v784
    %v786 = vpop.xlane.xlu0 %785
    %vm787 = vcmp.eq.f32.partialorder %v784, %v786
    %v788 = vsel %vm787, %v783, inf
    %789 = vmin.xlane.f32.xlu0 %v788
    %v790 = vpop.xlane.xlu0 %789
    %v791 = vcvt.f32.s32 %v790
    %v792 = vcvt.f32.s32 %v786
    %v793 = vshll.u32 %v792, 16
    %v794 = vadd.s32 %v793, %v791
    %v795 = vand.u32 %v623, 65535
    %v796 = vshra.s32 %v623, 16
    %v797 = vcvt.s32.f32 %v795
    %v798 = vcvt.s32.f32 %v796
    %799 = vmin.xlane.f32.xlu0 %v798
    %v800 = vpop.xlane.xlu0 %799
    %vm801 = vcmp.eq.f32.partialorder %v798, %v800
    %v802 = vsel %vm801, %v797, inf
    %803 = vmin.xlane.f32.xlu0 %v802
    %v804 = vpop.xlane.xlu0 %803
    %v805 = vcvt.f32.s32 %v804
    %v806 = vcvt.f32.s32 %v800
    %v807 = vshll.u32 %v806, 16
    %v808 = vadd.s32 %v807, %v805
    %v809 = vand.u32 %v624, 65535
    %v810 = vshra.s32 %v624, 16
    %v811 = vcvt.s32.f32 %v809
    %v812 = vcvt.s32.f32 %v810
    %813 = vmin.xlane.f32.xlu0 %v812
    %v814 = vpop.xlane.xlu0 %813
    %vm815 = vcmp.eq.f32.partialorder %v812, %v814
    %v816 = vsel %vm815, %v811, inf
    %817 = vmin.xlane.f32.xlu0 %v816
    %v818 = vpop.xlane.xlu0 %817
    %v819 = vcvt.f32.s32 %v818
    %v820 = vcvt.f32.s32 %v814
    %v821 = vshll.u32 %v820, 16
    %v822 = vadd.s32 %v821, %v819
    %v823 = vand.u32 %v625, 65535
    %v824 = vshra.s32 %v625, 16
    %v825 = vcvt.s32.f32 %v823
    %v826 = vcvt.s32.f32 %v824
    %827 = vmin.xlane.f32.xlu0 %v826
    %v828 = vpop.xlane.xlu0 %827
    %vm829 = vcmp.eq.f32.partialorder %v826, %v828
    %v830 = vsel %vm829, %v825, inf
    %831 = vmin.xlane.f32.xlu0 %v830
    %v832 = vpop.xlane.xlu0 %831
    %v833 = vcvt.f32.s32 %v832
    %v834 = vcvt.f32.s32 %v828
    %v835 = vshll.u32 %v834, 16
    %v836 = vadd.s32 %v835, %v833
    %v837 = vand.u32 %v626, 65535
    %v838 = vshra.s32 %v626, 16
    %v839 = vcvt.s32.f32 %v837
    %v840 = vcvt.s32.f32 %v838
    %841 = vmin.xlane.f32.xlu0 %v840
    %v842 = vpop.xlane.xlu0 %841
    %vm843 = vcmp.eq.f32.partialorder %v840, %v842
    %v844 = vsel %vm843, %v839, inf
    %845 = vmin.xlane.f32.xlu0 %v844
    %v846 = vpop.xlane.xlu0 %845
    %v847 = vcvt.f32.s32 %v846
    %v848 = vcvt.f32.s32 %v842
    %v849 = vshll.u32 %v848, 16
    %v850 = vadd.s32 %v849, %v847
    %vm851 = vcmp.eq.s32.totalorder %v640, %v401
    %vm852 = vcmp.eq.s32.totalorder %v654, %v402
    %vm853 = vcmp.eq.s32.totalorder %v668, %v403
    %vm854 = vcmp.eq.s32.totalorder %v682, %v404
    %vm855 = vcmp.eq.s32.totalorder %v696, %v405
    %vm856 = vcmp.eq.s32.totalorder %v710, %v406
    %vm857 = vcmp.eq.s32.totalorder %v724, %v407
    %vm858 = vcmp.eq.s32.totalorder %v738, %v408
    %vm859 = vcmp.eq.s32.totalorder %v752, %v409
    %vm860 = vcmp.eq.s32.totalorder %v766, %v410
    %vm861 = vcmp.eq.s32.totalorder %v780, %v411
    %vm862 = vcmp.eq.s32.totalorder %v794, %v412
    %vm863 = vcmp.eq.s32.totalorder %v808, %v413
    %vm864 = vcmp.eq.s32.totalorder %v822, %v414
    %vm865 = vcmp.eq.s32.totalorder %v836, %v415
    %vm866 = vcmp.eq.s32.totalorder %v850, %v416
    %vm867 = vmand %vm241, %vm851
    %vm868 = vmand %vm242, %vm852
    %vm869 = vmand %vm243, %vm853
    %vm870 = vmand %vm244, %vm854
    %vm871 = vmand %vm245, %vm855
    %vm872 = vmand %vm246, %vm856
    %vm873 = vmand %vm247, %vm857
    %vm874 = vmand %vm248, %vm858
    %vm875 = vmand %vm249, %vm859
    %vm876 = vmand %vm250, %vm860
    %vm877 = vmand %vm251, %vm861
    %vm878 = vmand %vm252, %vm862
    %vm879 = vmand %vm253, %vm863
    %vm880 = vmand %vm254, %vm864
    %vm881 = vmand %vm255, %vm865
    %vm882 = vmand %vm256, %vm866
    %v883 = vsel %vm867, 1.0, 0.0
    %v884 = vsel %vm868, 1.0, 0.0
    %v885 = vsel %vm869, 1.0, 0.0
    %v886 = vsel %vm870, 1.0, 0.0
    %v887 = vsel %vm871, 1.0, 0.0
    %v888 = vsel %vm872, 1.0, 0.0
    %v889 = vsel %vm873, 1.0, 0.0
    %v890 = vsel %vm874, 1.0, 0.0
    %v891 = vsel %vm875, 1.0, 0.0
    %v892 = vsel %vm876, 1.0, 0.0
    %v893 = vsel %vm877, 1.0, 0.0
    %v894 = vsel %vm878, 1.0, 0.0
    %v895 = vsel %vm879, 1.0, 0.0
    %v896 = vsel %vm880, 1.0, 0.0
    %v897 = vsel %vm881, 1.0, 0.0
    %v898 = vsel %vm882, 1.0, 0.0
    %vm899 = vcmp.eq.s32.totalorder %v418, %v640
    %vm900 = vcmp.eq.s32.totalorder %v418, %v654
    %vm901 = vcmp.eq.s32.totalorder %v418, %v668
    %vm902 = vcmp.eq.s32.totalorder %v418, %v682
    %vm903 = vcmp.eq.s32.totalorder %v418, %v696
    %vm904 = vcmp.eq.s32.totalorder %v418, %v710
    %vm905 = vcmp.eq.s32.totalorder %v418, %v724
    %vm906 = vcmp.eq.s32.totalorder %v418, %v738
    %vm907 = vcmp.eq.s32.totalorder %v418, %v752
    %vm908 = vcmp.eq.s32.totalorder %v418, %v766
    %vm909 = vcmp.eq.s32.totalorder %v418, %v780
    %vm910 = vcmp.eq.s32.totalorder %v418, %v794
    %vm911 = vcmp.eq.s32.totalorder %v418, %v808
    %vm912 = vcmp.eq.s32.totalorder %v418, %v822
    %vm913 = vcmp.eq.s32.totalorder %v418, %v836
    %vm914 = vcmp.eq.s32.totalorder %v418, %v850
    %v915 = vsel %vm899, 1, 0
    %v916 = vsel %vm900, 1, 0
    %v917 = vsel %vm901, 1, 0
    %v918 = vsel %vm902, 1, 0
    %v919 = vsel %vm903, 1, 0
    %v920 = vsel %vm904, 1, 0
    %v921 = vsel %vm905, 1, 0
    %v922 = vsel %vm906, 1, 0
    %v923 = vsel %vm907, 1, 0
    %v924 = vsel %vm908, 1, 0
    %v925 = vsel %vm909, 1, 0
    %v926 = vsel %vm910, 1, 0
    %v927 = vsel %vm911, 1, 0
    %v928 = vsel %vm912, 1, 0
    %v929 = vsel %vm913, 1, 0
    %v930 = vsel %vm914, 1, 0
    %v931 = vcvt.s32.f32 %v915
    %v932 = vcvt.s32.f32 %v916
    %v933 = vcvt.s32.f32 %v917
    %v934 = vcvt.s32.f32 %v918
    %v935 = vcvt.s32.f32 %v919
    %v936 = vcvt.s32.f32 %v920
    %v937 = vcvt.s32.f32 %v921
    %v938 = vcvt.s32.f32 %v922
    %v939 = vcvt.s32.f32 %v923
    %v940 = vcvt.s32.f32 %v924
    %v941 = vcvt.s32.f32 %v925
    %v942 = vcvt.s32.f32 %v926
    %v943 = vcvt.s32.f32 %v927
    %v944 = vcvt.s32.f32 %v928
    %v945 = vcvt.s32.f32 %v929
    %v946 = vcvt.s32.f32 %v930
    %v947 = vpack.c.bf16 %v932, %v931
    %v948 = vpack.c.bf16 %v934, %v933
    %v949 = vpack.c.bf16 %v936, %v935
    %v950 = vpack.c.bf16 %v938, %v937
    %v951 = vpack.c.bf16 %v940, %v939
    %v952 = vpack.c.bf16 %v942, %v941
    %v953 = vpack.c.bf16 %v944, %v943
    %v954 = vpack.c.bf16 %v946, %v945
    %v955 = vld [vmem:[%s5] sm:$0xf]
    %v956 = vld [vmem:[%s5 + $0x4] sm:$0xf]
    %v957 = vld [vmem:[%s5 + $0x8] sm:$0xf]
    %v958 = vld [vmem:[%s5 + $0xc] sm:$0xf]
    %v959 = vld [vmem:[%s5 + $0x10] sm:$0xf]
    %v960 = vld [vmem:[%s5 + $0x14] sm:$0xf]
    %v961 = vld [vmem:[%s5 + $0x18] sm:$0xf]
    %v962 = vld [vmem:[%s5 + $0x1c] sm:$0xf]
    %v963 = vld [vmem:[%s5 + $0x20] sm:$0xf]
    %v964 = vld [vmem:[%s5 + $0x24] sm:$0xf]
    %v965 = vld [vmem:[%s5 + $0x28] sm:$0xf]
    %v966 = vld [vmem:[%s5 + $0x2c] sm:$0xf]
    %v967 = vld [vmem:[%s5 + $0x30] sm:$0xf]
    %v968 = vld [vmem:[%s5 + $0x34] sm:$0xf]
    %v969 = vld [vmem:[%s5 + $0x38] sm:$0xf]
    %v970 = vld [vmem:[%s5 + $0x3c] sm:$0xf]
    %v987 = vunpack.c.l.b16 %v955
    %v988 = vunpack.c.l.b16 %v956
    %v989 = vunpack.c.l.b16 %v957
    %v990 = vunpack.c.l.b16 %v958
    %v991 = vunpack.c.l.b16 %v959
    %v992 = vunpack.c.l.b16 %v960
    %v993 = vunpack.c.l.b16 %v961
    %v994 = vunpack.c.l.b16 %v962
    %v995 = vunpack.c.l.b16 %v963
    %v996 = vunpack.c.l.b16 %v964
    %v997 = vunpack.c.l.b16 %v965
    %v998 = vunpack.c.l.b16 %v966
    %v999 = vunpack.c.l.b16 %v967
    %v1000 = vunpack.c.l.b16 %v968
    %v1001 = vunpack.c.l.b16 %v969
    %v1002 = vunpack.c.l.b16 %v970
    %v1003 = vpack.c.b16 %v988, %v987
    %v1004 = vpack.c.b16 %v990, %v989
    %v1005 = vpack.c.b16 %v992, %v991
    %v1006 = vpack.c.b16 %v994, %v993
    %v1007 = vpack.c.b16 %v996, %v995
    %v1008 = vpack.c.b16 %v998, %v997
    %v1009 = vpack.c.b16 %v1000, %v999
    %v1010 = vpack.c.b16 %v1002, %v1001
    %1019 = vmatpush.bf16.msra.mxu0 %v1010
    %1020 = vmatpush.bf16.msra.mxu0 %v1009
    %1021 = vmatpush.bf16.msra.mxu0 %v1008
    %1022 = vmatpush.bf16.msra.mxu0 %v1007
    %1023 = vmatpush.bf16.msra.mxu0 %v1006
    %1024 = vmatpush.bf16.msra.mxu0 %v1005
    %1025 = vmatpush.bf16.msra.mxu0 %v1004
    %1026 = vmatpush.bf16.msra.mxu0 %v1003
    %1027 = vmatmul.bf16.gmra.mxu0 %v947
    %v1028 = vpop.f32.mrf.mxu0
    %v1029 = vadd.f32 0.0, %v1028
    %v1030 = vpop.f32.mrf.mxu0
    %v1031 = vadd.f32 0.0, %v1030
    %1032 = vmatmul.bf16.gmra.mxu0 %v948
    %v1033 = vpop.f32.mrf.mxu0
    %v1034 = vadd.f32 0.0, %v1033
    %v1035 = vpop.f32.mrf.mxu0
    %v1036 = vadd.f32 0.0, %v1035
    %1037 = vmatmul.bf16.gmra.mxu0 %v949
    %v1038 = vpop.f32.mrf.mxu0
    %v1039 = vadd.f32 0.0, %v1038
    %v1040 = vpop.f32.mrf.mxu0
    %v1041 = vadd.f32 0.0, %v1040
    %1042 = vmatmul.bf16.gmra.mxu0 %v950
    %v1043 = vpop.f32.mrf.mxu0
    %v1044 = vadd.f32 0.0, %v1043
    %v1045 = vpop.f32.mrf.mxu0
    %v1046 = vadd.f32 0.0, %v1045
    %1047 = vmatmul.bf16.gmra.mxu0 %v951
    %v1048 = vpop.f32.mrf.mxu0
    %v1049 = vadd.f32 0.0, %v1048
    %v1050 = vpop.f32.mrf.mxu0
    %v1051 = vadd.f32 0.0, %v1050
    %1052 = vmatmul.bf16.gmra.mxu0 %v952
    %v1053 = vpop.f32.mrf.mxu0
    %v1054 = vadd.f32 0.0, %v1053
    %v1055 = vpop.f32.mrf.mxu0
    %v1056 = vadd.f32 0.0, %v1055
    %1057 = vmatmul.bf16.gmra.mxu0 %v953
    %v1058 = vpop.f32.mrf.mxu0
    %v1059 = vadd.f32 0.0, %v1058
    %v1060 = vpop.f32.mrf.mxu0
    %v1061 = vadd.f32 0.0, %v1060
    %1062 = vmatmul.bf16.gmra.mxu0 %v954
    %v1063 = vpop.f32.mrf.mxu0
    %v1064 = vadd.f32 0.0, %v1063
    %v1065 = vpop.f32.mrf.mxu0
    %v1066 = vadd.f32 0.0, %v1065
    %1067 = vdwg.mxu0
    %v1068 = vld [vmem:[%s4] sm:$0xf]
    %v1069 = vld [vmem:[%s4 + $0x4] sm:$0xf]
    %v1070 = vld [vmem:[%s4 + $0x8] sm:$0xf]
    %v1071 = vld [vmem:[%s4 + $0xc] sm:$0xf]
    %v1072 = vld [vmem:[%s4 + $0x10] sm:$0xf]
    %v1073 = vld [vmem:[%s4 + $0x14] sm:$0xf]
    %v1074 = vld [vmem:[%s4 + $0x18] sm:$0xf]
    %v1075 = vld [vmem:[%s4 + $0x1c] sm:$0xf]
    %v1076 = vld [vmem:[%s4 + $0x20] sm:$0xf]
    %v1077 = vld [vmem:[%s4 + $0x24] sm:$0xf]
    %v1078 = vld [vmem:[%s4 + $0x28] sm:$0xf]
    %v1079 = vld [vmem:[%s4 + $0x2c] sm:$0xf]
    %v1080 = vld [vmem:[%s4 + $0x30] sm:$0xf]
    %v1081 = vld [vmem:[%s4 + $0x34] sm:$0xf]
    %v1082 = vld [vmem:[%s4 + $0x38] sm:$0xf]
    %v1083 = vld [vmem:[%s4 + $0x3c] sm:$0xf]
    %v1084 = vunpack.c.l.bf16 %v1068
    %v1085 = vunpack.c.l.bf16 %v1069
    %v1086 = vunpack.c.l.bf16 %v1070
    %v1087 = vunpack.c.l.bf16 %v1071
    %v1088 = vunpack.c.l.bf16 %v1072
    %v1089 = vunpack.c.l.bf16 %v1073
    %v1090 = vunpack.c.l.bf16 %v1074
    %v1091 = vunpack.c.l.bf16 %v1075
    %v1092 = vunpack.c.l.bf16 %v1076
    %v1093 = vunpack.c.l.bf16 %v1077
    %v1094 = vunpack.c.l.bf16 %v1078
    %v1095 = vunpack.c.l.bf16 %v1079
    %v1096 = vunpack.c.l.bf16 %v1080
    %v1097 = vunpack.c.l.bf16 %v1081
    %v1098 = vunpack.c.l.bf16 %v1082
    %v1099 = vunpack.c.l.bf16 %v1083
    %v1100 = vsub.f32 %v1029, %v1084
    %v1101 = vsub.f32 %v1031, %v1085
    %v1102 = vsub.f32 %v1034, %v1086
    %v1103 = vsub.f32 %v1036, %v1087
    %v1104 = vsub.f32 %v1039, %v1088
    %v1105 = vsub.f32 %v1041, %v1089
    %v1106 = vsub.f32 %v1044, %v1090
    %v1107 = vsub.f32 %v1046, %v1091
    %v1108 = vsub.f32 %v1049, %v1092
    %v1109 = vsub.f32 %v1051, %v1093
    %v1110 = vsub.f32 %v1054, %v1094
    %v1111 = vsub.f32 %v1056, %v1095
    %v1112 = vsub.f32 %v1059, %v1096
    %v1113 = vsub.f32 %v1061, %v1097
    %v1114 = vsub.f32 %v1064, %v1098
    %v1115 = vsub.f32 %v1066, %v1099
    %v1116 = vand.u32 2147483647, %v1100
    %v1117 = vand.u32 2147483647, %v1101
    %v1118 = vand.u32 2147483647, %v1102
    %v1119 = vand.u32 2147483647, %v1103
    %v1120 = vand.u32 2147483647, %v1104
    %v1121 = vand.u32 2147483647, %v1105
    %v1122 = vand.u32 2147483647, %v1106
    %v1123 = vand.u32 2147483647, %v1107
    %v1124 = vand.u32 2147483647, %v1108
    %v1125 = vand.u32 2147483647, %v1109
    %v1126 = vand.u32 2147483647, %v1110
    %v1127 = vand.u32 2147483647, %v1111
    %v1128 = vand.u32 2147483647, %v1112
    %v1129 = vand.u32 2147483647, %v1113
    %v1130 = vand.u32 2147483647, %v1114
    %v1131 = vand.u32 2147483647, %v1115
    %1132 = vadd.xlane.f32.xlu0 %v1116
    %v1133 = vpop.xlane.xlu0 %1132
    %1134 = vadd.xlane.f32.xlu0 %v1117
    %v1135 = vpop.xlane.xlu0 %1134
    %1136 = vadd.xlane.f32.xlu0 %v1118
    %v1137 = vpop.xlane.xlu0 %1136
    %1138 = vadd.xlane.f32.xlu0 %v1119
    %v1139 = vpop.xlane.xlu0 %1138
    %1140 = vadd.xlane.f32.xlu0 %v1120
    %v1141 = vpop.xlane.xlu0 %1140
    %1142 = vadd.xlane.f32.xlu0 %v1121
    %v1143 = vpop.xlane.xlu0 %1142
    %1144 = vadd.xlane.f32.xlu0 %v1122
    %v1145 = vpop.xlane.xlu0 %1144
    %1146 = vadd.xlane.f32.xlu0 %v1123
    %v1147 = vpop.xlane.xlu0 %1146
    %1148 = vadd.xlane.f32.xlu0 %v1124
    %v1149 = vpop.xlane.xlu0 %1148
    %1150 = vadd.xlane.f32.xlu0 %v1125
    %v1151 = vpop.xlane.xlu0 %1150
    %1152 = vadd.xlane.f32.xlu0 %v1126
    %v1153 = vpop.xlane.xlu0 %1152
    %1154 = vadd.xlane.f32.xlu0 %v1127
    %v1155 = vpop.xlane.xlu0 %1154
    %1156 = vadd.xlane.f32.xlu0 %v1128
    %v1157 = vpop.xlane.xlu0 %1156
    %1158 = vadd.xlane.f32.xlu0 %v1129
    %v1159 = vpop.xlane.xlu0 %1158
    %1160 = vadd.xlane.f32.xlu0 %v1130
    %v1161 = vpop.xlane.xlu0 %1160
    %1162 = vadd.xlane.f32.xlu0 %v1131
    %v1163 = vpop.xlane.xlu0 %1162
    %v1164 = vsel %vm241, %v531, 0.0
    %v1165 = vsel %vm242, %v532, 0.0
    %v1166 = vsel %vm243, %v533, 0.0
    %v1167 = vsel %vm244, %v534, 0.0
    %v1168 = vsel %vm245, %v535, 0.0
    %v1169 = vsel %vm246, %v536, 0.0
    %v1170 = vsel %vm247, %v537, 0.0
    %v1171 = vsel %vm248, %v538, 0.0
    %v1172 = vsel %vm249, %v539, 0.0
    %v1173 = vsel %vm250, %v540, 0.0
    %v1174 = vsel %vm251, %v541, 0.0
    %v1175 = vsel %vm252, %v542, 0.0
    %v1176 = vsel %vm253, %v543, 0.0
    %v1177 = vsel %vm254, %v544, 0.0
    %v1178 = vsel %vm255, %v545, 0.0
    %v1179 = vsel %vm256, %v546, 0.0
    %vm1180 = vcmask 7168
    %v1181 = vsel %vm1180, %v1164, 0.0
    %v1182 = vsel %vm1180, %v1165, 0.0
    %v1183 = vadd.f32 %v1181, %v1182
    %v1184 = vsel %vm1180, %v1166, 0.0
    %v1185 = vadd.f32 %v1183, %v1184
    %v1186 = vsel %vm1180, %v1167, 0.0
    %v1187 = vadd.f32 %v1185, %v1186
    %v1188 = vsel %vm1180, %v1168, 0.0
    %v1189 = vadd.f32 %v1187, %v1188
    %v1190 = vsel %vm1180, %v1169, 0.0
    %v1191 = vadd.f32 %v1189, %v1190
    %v1192 = vsel %vm1180, %v1170, 0.0
    %v1193 = vadd.f32 %v1191, %v1192
    %v1194 = vsel %vm1180, %v1171, 0.0
    %v1195 = vadd.f32 %v1193, %v1194
    %v1196 = vsel %vm1180, %v1172, 0.0
    %v1197 = vadd.f32 %v1195, %v1196
    %v1198 = vsel %vm1180, %v1173, 0.0
    %v1199 = vadd.f32 %v1197, %v1198
    %v1200 = vsel %vm1180, %v1174, 0.0
    %v1201 = vadd.f32 %v1199, %v1200
    %v1202 = vsel %vm1180, %v1175, 0.0
    %v1203 = vadd.f32 %v1201, %v1202
    %v1204 = vsel %vm1180, %v1176, 0.0
    %v1205 = vadd.f32 %v1203, %v1204
    %v1206 = vsel %vm1180, %v1177, 0.0
    %v1207 = vadd.f32 %v1205, %v1206
    %v1208 = vsel %vm1180, %v1178, 0.0
    %v1209 = vadd.f32 %v1207, %v1208
    %v1210 = vsel %vm1180, %v1179, 0.0
    %v1211 = vadd.f32 %v1209, %v1210
    %1212 = vadd.xlane.f32.xlu0 %v1211
    %v1213 = vpop.xlane.xlu0 %1212
    %v1214 = vrot.slane %v1213, 4
    %v1215 = vadd.f32 %v1213, %v1214
    %v1216 = vrot.slane %v1215, 2
    %v1217 = vadd.f32 %v1215, %v1216
    %v1218 = vrot.slane %v1217, 1
    %v1219 = vadd.f32 %v1217, %v1218
    %s1220 = vtos %v1219
    %v1221 = vsel %vm241, %v564, 0.0
    %v1222 = vsel %vm242, %v566, 0.0
    %v1223 = vsel %vm243, %v568, 0.0
    %v1224 = vsel %vm244, %v570, 0.0
    %v1225 = vsel %vm245, %v572, 0.0
    %v1226 = vsel %vm246, %v574, 0.0
    %v1227 = vsel %vm247, %v576, 0.0
    %v1228 = vsel %vm248, %v578, 0.0
    %v1229 = vsel %vm249, %v580, 0.0
    %v1230 = vsel %vm250, %v582, 0.0
    %v1231 = vsel %vm251, %v584, 0.0
    %v1232 = vsel %vm252, %v586, 0.0
    %v1233 = vsel %vm253, %v588, 0.0
    %v1234 = vsel %vm254, %v590, 0.0
    %v1235 = vsel %vm255, %v592, 0.0
    %v1236 = vsel %vm256, %v594, 0.0
    %v1237 = vsel %vm1180, %v1221, 0.0
    %v1238 = vsel %vm1180, %v1222, 0.0
    %v1239 = vadd.f32 %v1237, %v1238
    %v1240 = vsel %vm1180, %v1223, 0.0
    %v1241 = vadd.f32 %v1239, %v1240
    %v1242 = vsel %vm1180, %v1224, 0.0
    %v1243 = vadd.f32 %v1241, %v1242
    %v1244 = vsel %vm1180, %v1225, 0.0
    %v1245 = vadd.f32 %v1243, %v1244
    %v1246 = vsel %vm1180, %v1226, 0.0
    %v1247 = vadd.f32 %v1245, %v1246
    %v1248 = vsel %vm1180, %v1227, 0.0
    %v1249 = vadd.f32 %v1247, %v1248
    %v1250 = vsel %vm1180, %v1228, 0.0
    %v1251 = vadd.f32 %v1249, %v1250
    %v1252 = vsel %vm1180, %v1229, 0.0
    %v1253 = vadd.f32 %v1251, %v1252
    %v1254 = vsel %vm1180, %v1230, 0.0
    %v1255 = vadd.f32 %v1253, %v1254
    %v1256 = vsel %vm1180, %v1231, 0.0
    %v1257 = vadd.f32 %v1255, %v1256
    %v1258 = vsel %vm1180, %v1232, 0.0
    %v1259 = vadd.f32 %v1257, %v1258
    %v1260 = vsel %vm1180, %v1233, 0.0
    %v1261 = vadd.f32 %v1259, %v1260
    %v1262 = vsel %vm1180, %v1234, 0.0
    %v1263 = vadd.f32 %v1261, %v1262
    %v1264 = vsel %vm1180, %v1235, 0.0
    %v1265 = vadd.f32 %v1263, %v1264
    %v1266 = vsel %vm1180, %v1236, 0.0
    %v1267 = vadd.f32 %v1265, %v1266
    %1268 = vadd.xlane.f32.xlu0 %v1267
    %v1269 = vpop.xlane.xlu0 %1268
    %v1270 = vrot.slane %v1269, 4
    %v1271 = vadd.f32 %v1269, %v1270
    %v1272 = vrot.slane %v1271, 2
    %v1273 = vadd.f32 %v1271, %v1272
    %v1274 = vrot.slane %v1273, 1
    %v1275 = vadd.f32 %v1273, %v1274
    %s1276 = vtos %v1275
    %v1277 = vsel %vm1180, %v883, 0.0
    %v1278 = vsel %vm1180, %v884, 0.0
    %v1279 = vadd.f32 %v1277, %v1278
    %v1280 = vsel %vm1180, %v885, 0.0
    %v1281 = vadd.f32 %v1279, %v1280
    %v1282 = vsel %vm1180, %v886, 0.0
    %v1283 = vadd.f32 %v1281, %v1282
    %v1284 = vsel %vm1180, %v887, 0.0
    %v1285 = vadd.f32 %v1283, %v1284
    %v1286 = vsel %vm1180, %v888, 0.0
    %v1287 = vadd.f32 %v1285, %v1286
    %v1288 = vsel %vm1180, %v889, 0.0
    %v1289 = vadd.f32 %v1287, %v1288
    %v1290 = vsel %vm1180, %v890, 0.0
    %v1291 = vadd.f32 %v1289, %v1290
    %v1292 = vsel %vm1180, %v891, 0.0
    %v1293 = vadd.f32 %v1291, %v1292
    %v1294 = vsel %vm1180, %v892, 0.0
    %v1295 = vadd.f32 %v1293, %v1294
    %v1296 = vsel %vm1180, %v893, 0.0
    %v1297 = vadd.f32 %v1295, %v1296
    %v1298 = vsel %vm1180, %v894, 0.0
    %v1299 = vadd.f32 %v1297, %v1298
    %v1300 = vsel %vm1180, %v895, 0.0
    %v1301 = vadd.f32 %v1299, %v1300
    %v1302 = vsel %vm1180, %v896, 0.0
    %v1303 = vadd.f32 %v1301, %v1302
    %v1304 = vsel %vm1180, %v897, 0.0
    %v1305 = vadd.f32 %v1303, %v1304
    %v1306 = vsel %vm1180, %v898, 0.0
    %v1307 = vadd.f32 %v1305, %v1306
    %1308 = vadd.xlane.f32.xlu0 %v1307
    %v1309 = vpop.xlane.xlu0 %1308
    %v1310 = vrot.slane %v1309, 4
    %v1311 = vadd.f32 %v1309, %v1310
    %v1312 = vrot.slane %v1311, 2
    %v1313 = vadd.f32 %v1311, %v1312
    %v1314 = vrot.slane %v1313, 1
    %v1315 = vadd.f32 %v1313, %v1314
    %s1316 = vtos %v1315
    %v1317 = vsel %vm241, %v1133, 0.0
    %v1318 = vsel %vm242, %v1135, 0.0
    %v1319 = vsel %vm243, %v1137, 0.0
    %v1320 = vsel %vm244, %v1139, 0.0
    %v1321 = vsel %vm245, %v1141, 0.0
    %v1322 = vsel %vm246, %v1143, 0.0
    %v1323 = vsel %vm247, %v1145, 0.0
    %v1324 = vsel %vm248, %v1147, 0.0
    %v1325 = vsel %vm249, %v1149, 0.0
    %v1326 = vsel %vm250, %v1151, 0.0
    %v1327 = vsel %vm251, %v1153, 0.0
    %v1328 = vsel %vm252, %v1155, 0.0
    %v1329 = vsel %vm253, %v1157, 0.0
    %v1330 = vsel %vm254, %v1159, 0.0
    %v1331 = vsel %vm255, %v1161, 0.0
    %v1332 = vsel %vm256, %v1163, 0.0
    %v1333 = vsel %vm1180, %v1317, 0.0
    %v1334 = vsel %vm1180, %v1318, 0.0
    %v1335 = vadd.f32 %v1333, %v1334
    %v1336 = vsel %vm1180, %v1319, 0.0
    %v1337 = vadd.f32 %v1335, %v1336
    %v1338 = vsel %vm1180, %v1320, 0.0
    %v1339 = vadd.f32 %v1337, %v1338
    %v1340 = vsel %vm1180, %v1321, 0.0
    %v1341 = vadd.f32 %v1339, %v1340
    %v1342 = vsel %vm1180, %v1322, 0.0
    %v1343 = vadd.f32 %v1341, %v1342
    %v1344 = vsel %vm1180, %v1323, 0.0
    %v1345 = vadd.f32 %v1343, %v1344
    %v1346 = vsel %vm1180, %v1324, 0.0
    %v1347 = vadd.f32 %v1345, %v1346
    %v1348 = vsel %vm1180, %v1325, 0.0
    %v1349 = vadd.f32 %v1347, %v1348
    %v1350 = vsel %vm1180, %v1326, 0.0
    %v1351 = vadd.f32 %v1349, %v1350
    %v1352 = vsel %vm1180, %v1327, 0.0
    %v1353 = vadd.f32 %v1351, %v1352
    %v1354 = vsel %vm1180, %v1328, 0.0
    %v1355 = vadd.f32 %v1353, %v1354
    %v1356 = vsel %vm1180, %v1329, 0.0
    %v1357 = vadd.f32 %v1355, %v1356
    %v1358 = vsel %vm1180, %v1330, 0.0
    %v1359 = vadd.f32 %v1357, %v1358
    %v1360 = vsel %vm1180, %v1331, 0.0
    %v1361 = vadd.f32 %v1359, %v1360
    %v1362 = vsel %vm1180, %v1332, 0.0
    %v1363 = vadd.f32 %v1361, %v1362
    %1364 = vadd.xlane.f32.xlu0 %v1363
    %v1365 = vpop.xlane.xlu0 %1364
    %v1366 = vrot.slane %v1365, 4
    %v1367 = vadd.f32 %v1365, %v1366
    %v1368 = vrot.slane %v1367, 2
    %v1369 = vadd.f32 %v1367, %v1368
    %v1370 = vrot.slane %v1369, 1
    %v1371 = vadd.f32 %v1369, %v1370
    %s1372 = vtos %v1371
    %vm1373 = vcmp.eq.s32.totalorder %v418, 0
    %v1374 = vstv %s1220
    %v1375 = vsel %vm1373, %v1374, 0.0
    %vm1376 = vcmp.eq.s32.totalorder %v418, 1
    %v1377 = vstv %s1276
    %v1378 = vsel %vm1376, %v1377, 0.0
    %v1379 = vadd.f32 %v1375, %v1378
    %vm1380 = vcmp.eq.s32.totalorder %v418, 2
    %v1381 = vstv %s1316
    %v1382 = vsel %vm1380, %v1381, 0.0
    %v1383 = vadd.f32 %v1379, %v1382
    %vm1384 = vcmp.eq.s32.totalorder %v418, 3
    %v1385 = vstv %s1372
    %v1386 = vsel %vm1384, %v1385, 0.0
    %v1387 = vadd.f32 %v1383, %v1386
    %1388 = vst [vmem:[%s6] sm:$0xff] %v1387
    %1389 = vst [vmem:[#allocation2] sm:$0xff] %v640
    %1390 = vst [vmem:[#allocation2 + $0x8] sm:$0xff] %v654
    %1391 = vst [vmem:[#allocation2 + $0x10] sm:$0xff] %v668
    %1392 = vst [vmem:[#allocation2 + $0x18] sm:$0xff] %v682
    %1393 = vst [vmem:[#allocation2 + $0x20] sm:$0xff] %v696
    %1394 = vst [vmem:[#allocation2 + $0x28] sm:$0xff] %v710
    %1395 = vst [vmem:[#allocation2 + $0x30] sm:$0xff] %v724
    %1396 = vst [vmem:[#allocation2 + $0x38] sm:$0xff] %v738
    %1397 = vst [vmem:[#allocation2 + $0x40] sm:$0xff] %v752
    %1398 = vst [vmem:[#allocation2 + $0x48] sm:$0xff] %v766
    %1399 = vst [vmem:[#allocation2 + $0x50] sm:$0xff] %v780
    %1400 = vst [vmem:[#allocation2 + $0x58] sm:$0xff] %v794
    %1401 = vst [vmem:[#allocation2 + $0x60] sm:$0xff] %v808
    %1402 = vst [vmem:[#allocation2 + $0x68] sm:$0xff] %v822
    %1403 = vst [vmem:[#allocation2 + $0x70] sm:$0xff] %v836
    %1404 = vst [vmem:[#allocation2 + $0x78] sm:$0xff] %v850
    // Predicated region
    $region26: #{motiongen_forward.1} parent=1 // pred_check
      _
    $region27: #{motiongen_forward.1} parent=1 // pred_check_branch
      %1406 = sbr.rel (0) target = $region29
    $region28: #{motiongen_forward.1} parent=1 // pred_region
      _
    $region29: #{motiongen_forward.1} parent=1 // pred_fallthru
      _
    // Predicated region
    $region30: #{motiongen_forward.1} parent=1 // pred_check
      _
    $region31: #{motiongen_forward.1} parent=1 // pred_check_branch
      %1408 = sbr.rel (0) target = $region33
    $region32: #{motiongen_forward.1} parent=1 // pred_region
      // Predicated region
      $region34: #{motiongen_forward.1} parent=32 // pred_check
        _
      $region35: #{motiongen_forward.1} parent=32 // pred_check_branch
        %1410 = sbr.rel (0) target = $region37
      $region36: #{motiongen_forward.1} parent=32 // pred_region
        // Predicated region
        $region38: #{motiongen_forward.1} parent=36 // pred_check
          _
        $region39: #{motiongen_forward.1} parent=36 // pred_check_branch
          %1412 = sbr.rel (0) target = $region41
        $region40: #{motiongen_forward.1} parent=36 // pred_region
          // Predicated region
          $region53: #{motiongen_forward.1} parent=40 // pred_check
            _
          $region54: #{motiongen_forward.1} parent=40 // pred_check_branch
            %1430 = sbr.rel (0) target = $region56
          $region55: #{motiongen_forward.1} parent=40 // pred_region
            loop: start=0, step=1, limit=1
            $region57: #{motiongen_forward.1} parent=55 // loop_pre_header
              _
            $region58: #{motiongen_forward.1} parent=55 // loop_header
              %s1432 = sphi 0, %s1436
              %p1433 = scmp.ge.s32.totalorder %s1432, 1
              %s1437 = sphi [#allocation2], [#allocation2]
              %s1438 = sphi %s7, %s7
            $region59: #{motiongen_forward.1} parent=55 // loop_header_branch
              %1435 = sbr.rel (%p1433) target = $region63
            $region60: #{motiongen_forward.1} parent=55 // loop_body
              %v1439 = vld [vmem:[%s1437] sm:$0xff]
              %1440 = vst [vmem:[%s1438] sm:$0xff] %v1439
              %v1441 = vld [vmem:[%s1437 + $0x8] sm:$0xff]
              %1442 = vst [vmem:[%s1438 + $0x8] sm:$0xff] %v1441
            $region61: #{motiongen_forward.1} parent=55 // loop_footer
              %s1436 = sadd.s32 1, %s1432
            $region62: #{motiongen_forward.1} parent=55 // loop_footer_branch
              %1431 = sbr.rel target = $region58
            $region63: #{motiongen_forward.1} parent=55 // loop_exit
              _
          $region56: #{motiongen_forward.1} parent=40 // pred_fallthru
            _
          // Predicated region
          $region64: #{motiongen_forward.1} parent=40 // pred_check
            _
          $region65: #{motiongen_forward.1} parent=40 // pred_check_branch
            %1444 = sbr.rel target = $region67
          $region66: #{motiongen_forward.1} parent=40 // pred_region
            _
          $region67: #{motiongen_forward.1} parent=40 // pred_fallthru
            _
        $region41: #{motiongen_forward.1} parent=36 // pred_fallthru
          _
        // Predicated region
        $region42: #{motiongen_forward.1} parent=36 // pred_check
          _
        $region43: #{motiongen_forward.1} parent=36 // pred_check_branch
          %1414 = sbr.rel target = $region45
        $region44: #{motiongen_forward.1} parent=36 // pred_region
          %s1416 = ssub.s32 256, 1
          loop: start=0, step=1, limit=1
          $region46: #{motiongen_forward.1} parent=44 // loop_pre_header
            _
          $region47: #{motiongen_forward.1} parent=44 // loop_header
            %s1418 = sphi 0, %s1422
            %p1419 = scmp.ge.s32.totalorder %s1418, 1
            %s1423 = sphi [#allocation2], [#allocation2]
            %s1424 = sphi %s7, %s7
          $region48: #{motiongen_forward.1} parent=44 // loop_header_branch
            %1421 = sbr.rel (%p1419) target = $region52
          $region49: #{motiongen_forward.1} parent=44 // loop_body
            %v1425 = vld [vmem:[%s1423] sm:%s1416]
            %1426 = vst [vmem:[%s1424] sm:%s1416] %v1425
            %v1427 = vld [vmem:[%s1423 + $0x8] sm:%s1416]
            %1428 = vst [vmem:[%s1424 + $0x8] sm:%s1416] %v1427
          $region50: #{motiongen_forward.1} parent=44 // loop_footer
            %s1422 = sadd.s32 1, %s1418
          $region51: #{motiongen_forward.1} parent=44 // loop_footer_branch
            %1417 = sbr.rel target = $region47
          $region52: #{motiongen_forward.1} parent=44 // loop_exit
            _
        $region45: #{motiongen_forward.1} parent=36 // pred_fallthru
          _
      $region37: #{motiongen_forward.1} parent=32 // pred_fallthru
        _
      %1445 = vnop
    $region33: #{motiongen_forward.1} parent=1 // pred_fallthru
      _
    // Predicated region
    $region68: #{motiongen_forward.1} parent=1 // pred_check
      _
    $region69: #{motiongen_forward.1} parent=1 // pred_check_branch
      %1447 = sbr.rel (0) target = $region71
    $region70: #{motiongen_forward.1} parent=1 // pred_region
      _
    $region71: #{motiongen_forward.1} parent=1 // pred_fallthru
      _
    // Predicated region
    $region72: #{motiongen_forward.1} parent=1 // pred_check
      _
    $region73: #{motiongen_forward.1} parent=1 // pred_check_branch
      %1449 = sbr.rel (0) target = $region75
    $region74: #{motiongen_forward.1} parent=1 // pred_region
      _
    $region75: #{motiongen_forward.1} parent=1 // pred_fallthru
      _

</llo_original>
